<compile_context>
chip_gen: v7x
topology: tpu7x:2x2x1
jax: 0.10.0
libtpu: 0.0.40
codegen_flags: <defaults>
</compile_context>

<pallas_src>
import jax
import jax.numpy as jnp
from jax.experimental import pallas as pl
from jax.experimental.pallas import tpu as pltpu


def selector_kernel(x_ref, b1a_ref, da_ref, b1b_ref, db_ref, ch_ref, o_ref):
    # x_ref:  (1, TB)  -- TB batch elements on the lane axis
    # b1*_ref, d*_ref: (P, 1) columns (bias / diagonal eta per leaf)
    # ch_ref: (1, 1)   -- chooser parameter (pre-sigmoid)
    x = x_ref[...]                                          # (1, TB)
    inv_p = 1.0 / b1a_ref.shape[0]                          # static Python float

    # Leaf 1 (Utility_Increasing):  u_a = mean_p sigmoid((x + b1a_p) * da_p)
    sa = jax.nn.sigmoid((x + b1a_ref[...]) * da_ref[...])   # (P, TB), VPU + EUP
    ua = jnp.sum(sa, axis=0, keepdims=True) * inv_p         # (1, TB), XLU reduce

    # Leaf 2 (Utility_Decreasing):  u_b = 1 - mean_p sigmoid((x + b1b_p) * db_p)
    sb = jax.nn.sigmoid((x + b1b_ref[...]) * db_ref[...])   # (P, TB)
    ub = 1.0 - jnp.sum(sb, axis=0, keepdims=True) * inv_p   # (1, TB)

    # Selector blend: sigmoid(chooser) * u_a + (1 - sigmoid(chooser)) * u_b
    sw = jax.nn.sigmoid(ch_ref[...])                        # (1, 1)
    o_ref[...] = sw * ua + (1.0 - sw) * ub                  # lane-dense store


def selector_forward(x, b1_inc, eta_inc, b1_dec, eta_dec, chooser, *, tb=512):
    """Selector forward.

    x: (B, 1) float32.
    b1_inc/eta_inc/b1_dec/eta_dec: (P,) post-normalize leaf parameters
      (bias of bias_layer, diagonal of etas_layer) for the two children.
    chooser: scalar parameter (pre-sigmoid gate).
    """
    assert tb % 128 == 0, "batch tile must be a multiple of the 128-lane width"
    B = x.shape[0]
    P = b1_inc.shape[0]

    # Lane-dense layout: batch on lanes, padded to a multiple of tb.
    b_pad = pl.cdiv(B, tb) * tb
    xr = jnp.pad(x.reshape(1, B).astype(jnp.float32), ((0, 0), (0, b_pad - B)))

    b1a = b1_inc.reshape(P, 1).astype(jnp.float32)
    da = eta_inc.reshape(P, 1).astype(jnp.float32)
    b1b = b1_dec.reshape(P, 1).astype(jnp.float32)
    db = eta_dec.reshape(P, 1).astype(jnp.float32)
    ch = jnp.reshape(chooser, (1, 1)).astype(jnp.float32)

    out = pl.pallas_call(
        selector_kernel,
        out_shape=jax.ShapeDtypeStruct((1, b_pad), jnp.float32),
        grid_spec=pltpu.PrefetchScalarGridSpec(
            num_scalar_prefetch=0,
            grid=(b_pad // tb,),
            in_specs=[
                pl.BlockSpec((1, tb), lambda i: (0, i)),   # x tile (lane-dense)
                pl.BlockSpec((P, 1), lambda i: (0, 0)),    # b1 (increasing leaf)
                pl.BlockSpec((P, 1), lambda i: (0, 0)),    # eta diag (increasing)
                pl.BlockSpec((P, 1), lambda i: (0, 0)),    # b1 (decreasing leaf)
                pl.BlockSpec((P, 1), lambda i: (0, 0)),    # eta diag (decreasing)
                pl.BlockSpec((1, 1), lambda i: (0, 0)),    # chooser
            ],
            out_specs=pl.BlockSpec((1, tb), lambda i: (0, i)),
        ),
        compiler_params=pltpu.CompilerParams(
            dimension_semantics=("parallel",)),
    )(xr, b1a, da, b1b, db, ch)

    return out[0, :B].reshape(B, 1)


def init_leaf_params(key, nb_prim):
    """Post-normalize() parameters of one marginal-utility leaf.

    Mirrors the PyTorch init: bias_layer.bias = -rand(P) in (-1, 0];
    etas_layer.weight = rand(P,P)*P then clamp(0)*eye -> only the (positive)
    diagonal survives; output.weight = ones/P (captured by the 1/P mean in the
    kernel).  bias_layer.weight == ones is folded into `x + b1`.
    """
    k_bias, k_etas = jax.random.split(key, 2)
    b1 = -jax.random.uniform(k_bias, (nb_prim,), jnp.float32)
    eta_diag = jax.random.uniform(k_etas, (nb_prim,), jnp.float32) * nb_prim
    return b1, eta_diag


if __name__ == "__main__":
    nb_prim = 128
    batch = 8

    key = jax.random.PRNGKey(0)
    k_inc, k_dec, k_x = jax.random.split(key, 3)
    b1_inc, eta_inc = init_leaf_params(k_inc, nb_prim)
    b1_dec, eta_dec = init_leaf_params(k_dec, nb_prim)
    # Module inits chooser to 0.0; use a non-trivial "trained" value so the
    # blend of the two children is actually exercised.
    chooser = jnp.float32(0.7)
    x = jax.random.uniform(k_x, (batch, 1), jnp.float32)   # inputs in [0, 1)

    y = selector_forward(x, b1_inc, eta_inc, b1_dec, eta_dec, chooser)
    y = jax.block_until_ready(y)

    # Pure-JAX reference using the ORIGINAL dense formulation (full Linear
    # weights, post-normalize) to validate the structured shortcuts.
    def leaf_ref(xv, b1, eta_diag, increasing):
        P = b1.shape[0]
        w1 = jnp.ones((P, 1), jnp.float32)          # bias_layer.weight
        w2 = jnp.diag(eta_diag)                     # etas_layer.weight (diag)
        w3 = jnp.ones((1, P), jnp.float32) / P      # output.weight
        h = xv @ w1.T + b1[None, :]
        s = jax.nn.sigmoid(h @ w2.T)
        u = s @ w3.T
        return u if increasing else 1.0 - u

    sw_ref = jax.nn.sigmoid(chooser)
    y_ref = (sw_ref * leaf_ref(x, b1_inc, eta_inc, True)
             + (1.0 - sw_ref) * leaf_ref(x, b1_dec, eta_dec, False))

    assert y.shape == (batch, 1)
    assert jnp.allclose(y, y_ref, atol=1e-5, rtol=1e-5), (y, y_ref)

    print("KERNEL_OK")
</pallas_src>

<mosaic_0001>
module attributes {stable_mosaic.version = 11 : i64} {
  func.func @selector_kernel(%arg0: i32, %arg1: memref<1x512xf32, #tpu.memory_space<vmem>>, %arg2: memref<128x1xf32, #tpu.memory_space<vmem>>, %arg3: memref<128x1xf32, #tpu.memory_space<vmem>>, %arg4: memref<128x1xf32, #tpu.memory_space<vmem>>, %arg5: memref<128x1xf32, #tpu.memory_space<vmem>>, %arg6: memref<1x1xf32, #tpu.memory_space<vmem>>, %arg7: memref<1x512xf32, #tpu.memory_space<vmem>>) attributes {dimension_semantics = [#tpu.dimension_semantics<parallel>], iteration_bounds = array<i64: 1>, scalar_prefetch = 0 : i64, scratch_operands = 0 : i64, tpu.core_type = #tpu.core_type<tc>, window_params = [{transform_indices = @transform_0, window_bounds = array<i64: 1, 512>}, {pipeline_mode = #tpu.pipeline_mode<synchronous>, transform_indices = @transform_1, window_bounds = array<i64: 128, 1>}, {pipeline_mode = #tpu.pipeline_mode<synchronous>, transform_indices = @transform_2, window_bounds = array<i64: 128, 1>}, {pipeline_mode = #tpu.pipeline_mode<synchronous>, transform_indices = @transform_3, window_bounds = array<i64: 128, 1>}, {pipeline_mode = #tpu.pipeline_mode<synchronous>, transform_indices = @transform_4, window_bounds = array<i64: 128, 1>}, {pipeline_mode = #tpu.pipeline_mode<synchronous>, transform_indices = @transform_5, window_bounds = array<i64: 1, 1>}, {transform_indices = @transform_6, window_bounds = array<i64: 1, 512>}]} {
    %c0 = arith.constant 0 : index
    %c0_0 = arith.constant 0 : index
    %0 = vector.load %arg1[%c0, %c0_0] : memref<1x512xf32, #tpu.memory_space<vmem>>, vector<1x512xf32>
    %c0_1 = arith.constant 0 : index
    %c0_2 = arith.constant 0 : index
    %1 = vector.load %arg2[%c0_1, %c0_2] : memref<128x1xf32, #tpu.memory_space<vmem>>, vector<128x1xf32>
    %2 = vector.broadcast %0 : vector<1x512xf32> to vector<128x512xf32>
    %3 = vector.broadcast %1 : vector<128x1xf32> to vector<128x512xf32>
    %4 = arith.addf %2, %3 : vector<128x512xf32>
    %c0_3 = arith.constant 0 : index
    %c0_4 = arith.constant 0 : index
    %5 = vector.load %arg3[%c0_3, %c0_4] : memref<128x1xf32, #tpu.memory_space<vmem>>, vector<128x1xf32>
    %6 = vector.broadcast %5 : vector<128x1xf32> to vector<128x512xf32>
    %7 = arith.mulf %4, %6 : vector<128x512xf32>
    %8 = arith.negf %7 : vector<128x512xf32>
    %9 = math.exp %8 : vector<128x512xf32>
    %cst = arith.constant 1.000000e+00 : f32
    %10 = vector.broadcast %cst : f32 to vector<128x512xf32>
    %11 = arith.addf %10, %9 : vector<128x512xf32>
    %12 = arith.divf %10, %11 : vector<128x512xf32>
    %cst_5 = arith.constant dense<0.000000e+00> : vector<512xf32>
    %13 = vector.multi_reduction <add>, %12, %cst_5 [0] : vector<128x512xf32> to vector<512xf32>
    %14 = vector.shape_cast %13 : vector<512xf32> to vector<1x512xf32>
    %cst_6 = arith.constant 7.812500e-03 : f32
    %15 = vector.broadcast %cst_6 : f32 to vector<1x512xf32>
    %16 = arith.mulf %14, %15 : vector<1x512xf32>
    %c0_7 = arith.constant 0 : index
    %c0_8 = arith.constant 0 : index
    %17 = vector.load %arg4[%c0_7, %c0_8] : memref<128x1xf32, #tpu.memory_space<vmem>>, vector<128x1xf32>
    %18 = vector.broadcast %0 : vector<1x512xf32> to vector<128x512xf32>
    %19 = vector.broadcast %17 : vector<128x1xf32> to vector<128x512xf32>
    %20 = arith.addf %18, %19 : vector<128x512xf32>
    %c0_9 = arith.constant 0 : index
    %c0_10 = arith.constant 0 : index
    %21 = vector.load %arg5[%c0_9, %c0_10] : memref<128x1xf32, #tpu.memory_space<vmem>>, vector<128x1xf32>
    %22 = vector.broadcast %21 : vector<128x1xf32> to vector<128x512xf32>
    %23 = arith.mulf %20, %22 : vector<128x512xf32>
    %24 = arith.negf %23 : vector<128x512xf32>
    %25 = math.exp %24 : vector<128x512xf32>
    %cst_11 = arith.constant 1.000000e+00 : f32
    %26 = vector.broadcast %cst_11 : f32 to vector<128x512xf32>
    %27 = arith.addf %26, %25 : vector<128x512xf32>
    %28 = arith.divf %26, %27 : vector<128x512xf32>
    %cst_12 = arith.constant dense<0.000000e+00> : vector<512xf32>
    %29 = vector.multi_reduction <add>, %28, %cst_12 [0] : vector<128x512xf32> to vector<512xf32>
    %30 = vector.shape_cast %29 : vector<512xf32> to vector<1x512xf32>
    %cst_13 = arith.constant 7.812500e-03 : f32
    %31 = vector.broadcast %cst_13 : f32 to vector<1x512xf32>
    %32 = arith.mulf %30, %31 : vector<1x512xf32>
    %cst_14 = arith.constant 1.000000e+00 : f32
    %33 = vector.broadcast %cst_14 : f32 to vector<1x512xf32>
    %34 = arith.subf %33, %32 : vector<1x512xf32>
    %c0_15 = arith.constant 0 : index
    %c0_16 = arith.constant 0 : index
    %35 = vector.load %arg6[%c0_15, %c0_16] : memref<1x1xf32, #tpu.memory_space<vmem>>, vector<1x1xf32>
    %36 = arith.negf %35 : vector<1x1xf32>
    %37 = math.exp %36 : vector<1x1xf32>
    %cst_17 = arith.constant 1.000000e+00 : f32
    %38 = vector.broadcast %cst_17 : f32 to vector<1x1xf32>
    %39 = arith.addf %38, %37 : vector<1x1xf32>
    %40 = arith.divf %38, %39 : vector<1x1xf32>
    %41 = vector.broadcast %40 : vector<1x1xf32> to vector<1x512xf32>
    %42 = arith.mulf %41, %16 : vector<1x512xf32>
    %cst_18 = arith.constant 1.000000e+00 : f32
    %43 = vector.broadcast %cst_18 : f32 to vector<1x1xf32>
    %44 = arith.subf %43, %40 : vector<1x1xf32>
    %45 = vector.broadcast %44 : vector<1x1xf32> to vector<1x512xf32>
    %46 = arith.mulf %45, %34 : vector<1x512xf32>
    %47 = arith.addf %42, %46 : vector<1x512xf32>
    %c0_19 = arith.constant 0 : index
    %c0_20 = arith.constant 0 : index
    %48 = vector.load %arg7[%c0_19, %c0_20] : memref<1x512xf32, #tpu.memory_space<vmem>>, vector<1x512xf32>
    tpu.vector_store %arg7[%c0_19, %c0_20], %47 {strides = array<i32>} : memref<1x512xf32, #tpu.memory_space<vmem>>, vector<1x512xf32>,
    return
  }
  func.func @transform_0(%arg0: i32) -> (i32, i32) {
    %c0_i32 = arith.constant 0 : i32
    %c0_i32_0 = arith.constant 0 : i32
    return %c0_i32, %arg0 : i32, i32
  }
  func.func @transform_1(%arg0: i32) -> (i32, i32) {
    %c0_i32 = arith.constant 0 : i32
    %c0_i32_0 = arith.constant 0 : i32
    %c0_i32_1 = arith.constant 0 : i32
    return %c0_i32, %c0_i32_0 : i32, i32
  }
  func.func @transform_2(%arg0: i32) -> (i32, i32) {
    %c0_i32 = arith.constant 0 : i32
    %c0_i32_0 = arith.constant 0 : i32
    %c0_i32_1 = arith.constant 0 : i32
    return %c0_i32, %c0_i32_0 : i32, i32
  }
  func.func @transform_3(%arg0: i32) -> (i32, i32) {
    %c0_i32 = arith.constant 0 : i32
    %c0_i32_0 = arith.constant 0 : i32
    %c0_i32_1 = arith.constant 0 : i32
    return %c0_i32, %c0_i32_0 : i32, i32
  }
  func.func @transform_4(%arg0: i32) -> (i32, i32) {
    %c0_i32 = arith.constant 0 : i32
    %c0_i32_0 = arith.constant 0 : i32
    %c0_i32_1 = arith.constant 0 : i32
    return %c0_i32, %c0_i32_0 : i32, i32
  }
  func.func @transform_5(%arg0: i32) -> (i32, i32) {
    %c0_i32 = arith.constant 0 : i32
    %c0_i32_0 = arith.constant 0 : i32
    %c0_i32_1 = arith.constant 0 : i32
    return %c0_i32, %c0_i32_0 : i32, i32
  }
  func.func @transform_6(%arg0: i32) -> (i32, i32) {
    %c0_i32 = arith.constant 0 : i32
    %c0_i32_0 = arith.constant 0 : i32
    return %c0_i32, %arg0 : i32, i32
  }
}

</mosaic_0001>

<llo_original>
// kernel: tpu_custom_call.1
$region0: #{tpu_custom_call.1}
  #allocation0 [shape = 'u32[]', space=smem, size = 0x4, offset = 0x4, fixed_abs, tag = 'smem constant byte address 0x4 - core index']
  #allocation1 [shape = 'u32[144,128]{1,0:T(1,128)}', space=vmem, size = 0x12000, scoped, tag = 'internal scratch']
  #allocation2 [shape = 'f32[1,1]{1,0:T(1,128)S(1)}', space=vmem, size = 0x200, scoped, tag = 'scoped memory for tpu_custom_call.1']
  %s0 = inlined_call_operand.vmem [shape: f32[1,512], index: 0, kind: input, shape index: {}]
  %s1 = inlined_call_operand.vmem [shape: f32[128,1], index: 1, kind: input, shape index: {}]
  %s2 = inlined_call_operand.vmem [shape: f32[128,1], index: 2, kind: input, shape index: {}]
  %s3 = inlined_call_operand.vmem [shape: f32[128,1], index: 3, kind: input, shape index: {}]
  %s4 = inlined_call_operand.vmem [shape: f32[128,1], index: 4, kind: input, shape index: {}]
  %s5 = inlined_call_operand.<no memory space> [shape: f32[1,1], index: 5, kind: input, shape index: {}]
  %s6 = inlined_call_operand.hbm [shape: f32[1,512], index: 6, kind: output, shape index: {}]
  %s7 = sld [smem:[#allocation0]]
  $region34: #{tpu_custom_call.1} parent=0
    _
  %s9 = ssub.s32 1, %s7
  %s10 = scalar_select 0, %s9, %s7
  %v11 = vstv %s5
  %12 = vst [vmem:[#allocation2] sm:$0x1] %v11
  $region1: #{tpu_custom_call.1} parent=0
    #allocation3 [shape = 'u8[2048]{0}', space=vmem, size = 0x800, scoped, tag = 'output window, operand 0, single buffered']
    #allocation4 [shape = 's32[1]{0}', space=sflag, size = 0x4, scoped, tag = 'scoped memory for tpu_custom_call.1']
    %13 = vsyncpa [#allocation4], 0
    // Predicated region
    $region2: #{tpu_custom_call.1} parent=1 // pred_check
      _
    $region3: #{tpu_custom_call.1} parent=1 // pred_check_branch
      %15 = sbr.rel (0) target = $region5
    $region4: #{tpu_custom_call.1} parent=1 // pred_region
      _
    $region5: #{tpu_custom_call.1} parent=1 // pred_fallthru
      _
    // Predicated region
    $region6: #{tpu_custom_call.1} parent=1 // pred_check
      _
    $region7: #{tpu_custom_call.1} parent=1 // pred_check_branch
      %17 = sbr.rel (0) target = $region9
    $region8: #{tpu_custom_call.1} parent=1 // pred_region
      _
    $region9: #{tpu_custom_call.1} parent=1 // pred_fallthru
      _
    // Predicated region
    $region10: #{tpu_custom_call.1} parent=1 // pred_check
      _
    $region11: #{tpu_custom_call.1} parent=1 // pred_check_branch
      %19 = sbr.rel (0) target = $region13
    $region12: #{tpu_custom_call.1} parent=1 // pred_region
      _
    $region13: #{tpu_custom_call.1} parent=1 // pred_fallthru
      _
    // Predicated region
    $region14: #{tpu_custom_call.1} parent=1 // pred_check
      _
    $region15: #{tpu_custom_call.1} parent=1 // pred_check_branch
      %21 = sbr.rel (0) target = $region17
    $region16: #{tpu_custom_call.1} parent=1 // pred_region
      _
    $region17: #{tpu_custom_call.1} parent=1 // pred_fallthru
      _
    // Predicated region
    $region18: #{tpu_custom_call.1} parent=1 // pred_check
      _
    $region19: #{tpu_custom_call.1} parent=1 // pred_check_branch
      %23 = sbr.rel (0) target = $region21
    $region20: #{tpu_custom_call.1} parent=1 // pred_region
      _
    $region21: #{tpu_custom_call.1} parent=1 // pred_fallthru
      _
    // Predicated region
    $region22: #{tpu_custom_call.1} parent=1 // pred_check
      _
    $region23: #{tpu_custom_call.1} parent=1 // pred_check_branch
      %25 = sbr.rel (0) target = $region25
    $region24: #{tpu_custom_call.1} parent=1 // pred_region
      _
    $region25: #{tpu_custom_call.1} parent=1 // pred_fallthru
      _
    %v26 = vld [vmem:[%s0] sm:$0xf]
    %v27 = vld [vmem:[%s1] sm:$0xff]
    %v28 = vld [vmem:[%s1 + $0x8] sm:$0xff]
    %v29 = vld [vmem:[%s1 + $0x10] sm:$0xff]
    %v30 = vld [vmem:[%s1 + $0x18] sm:$0xff]
    %v31 = vld [vmem:[%s1 + $0x20] sm:$0xff]
    %v32 = vld [vmem:[%s1 + $0x28] sm:$0xff]
    %v33 = vld [vmem:[%s1 + $0x30] sm:$0xff]
    %v34 = vld [vmem:[%s1 + $0x38] sm:$0xff]
    %v35 = vld [vmem:[%s1 + $0x40] sm:$0xff]
    %v36 = vld [vmem:[%s1 + $0x48] sm:$0xff]
    %v37 = vld [vmem:[%s1 + $0x50] sm:$0xff]
    %v38 = vld [vmem:[%s1 + $0x58] sm:$0xff]
    %v39 = vld [vmem:[%s1 + $0x60] sm:$0xff]
    %v40 = vld [vmem:[%s1 + $0x68] sm:$0xff]
    %v41 = vld [vmem:[%s1 + $0x70] sm:$0xff]
    %v42 = vld [vmem:[%s1 + $0x78] sm:$0xff]
    %v44 = vlaneseq
    %v45 = vshrl.u32 %v44, 7
    %v46 = vsub.s32 0, %v45
    %v47 = vrot.slane %v26, %v46
    %v48 = vlaneseq
    %v49 = vshrl.u32 %v48, 7
    %v50 = vsub.s32 1, %v49
    %v51 = vrot.slane %v26, %v50
    %v52 = vlaneseq
    %v53 = vshrl.u32 %v52, 7
    %v54 = vsub.s32 2, %v53
    %v55 = vrot.slane %v26, %v54
    %v56 = vlaneseq
    %v57 = vshrl.u32 %v56, 7
    %v58 = vsub.s32 3, %v57
    %v59 = vrot.slane %v26, %v58
    %65 = vset.pattern.permute.xlu0 0
    %66 = vperm.xlu0 %65, %v27
    %v67 = vpop.permute.xlu0 %66
    %70 = vset.pattern.permute.xlu0 0
    %71 = vperm.xlu0 %70, %v28
    %v72 = vpop.permute.xlu0 %71
    %75 = vset.pattern.permute.xlu0 0
    %76 = vperm.xlu0 %75, %v29
    %v77 = vpop.permute.xlu0 %76
    %80 = vset.pattern.permute.xlu0 0
    %81 = vperm.xlu0 %80, %v30
    %v82 = vpop.permute.xlu0 %81
    %85 = vset.pattern.permute.xlu0 0
    %86 = vperm.xlu0 %85, %v31
    %v87 = vpop.permute.xlu0 %86
    %90 = vset.pattern.permute.xlu0 0
    %91 = vperm.xlu0 %90, %v32
    %v92 = vpop.permute.xlu0 %91
    %95 = vset.pattern.permute.xlu0 0
    %96 = vperm.xlu0 %95, %v33
    %v97 = vpop.permute.xlu0 %96
    %100 = vset.pattern.permute.xlu0 0
    %101 = vperm.xlu0 %100, %v34
    %v102 = vpop.permute.xlu0 %101
    %105 = vset.pattern.permute.xlu0 0
    %106 = vperm.xlu0 %105, %v35
    %v107 = vpop.permute.xlu0 %106
    %110 = vset.pattern.permute.xlu0 0
    %111 = vperm.xlu0 %110, %v36
    %v112 = vpop.permute.xlu0 %111
    %115 = vset.pattern.permute.xlu0 0
    %116 = vperm.xlu0 %115, %v37
    %v117 = vpop.permute.xlu0 %116
    %120 = vset.pattern.permute.xlu0 0
    %121 = vperm.xlu0 %120, %v38
    %v122 = vpop.permute.xlu0 %121
    %125 = vset.pattern.permute.xlu0 0
    %126 = vperm.xlu0 %125, %v39
    %v127 = vpop.permute.xlu0 %126
    %130 = vset.pattern.permute.xlu0 0
    %131 = vperm.xlu0 %130, %v40
    %v132 = vpop.permute.xlu0 %131
    %135 = vset.pattern.permute.xlu0 0
    %136 = vperm.xlu0 %135, %v41
    %v137 = vpop.permute.xlu0 %136
    %140 = vset.pattern.permute.xlu0 0
    %141 = vperm.xlu0 %140, %v42
    %v142 = vpop.permute.xlu0 %141
    %v144 = vadd.f32 %v47, %v67
    %v145 = vadd.f32 %v51, %v67
    %v146 = vadd.f32 %v55, %v67
    %v147 = vadd.f32 %v59, %v67
    %v148 = vadd.f32 %v47, %v72
    %v149 = vadd.f32 %v51, %v72
    %v150 = vadd.f32 %v55, %v72
    %v151 = vadd.f32 %v59, %v72
    %v152 = vadd.f32 %v47, %v77
    %v153 = vadd.f32 %v51, %v77
    %v154 = vadd.f32 %v55, %v77
    %v155 = vadd.f32 %v59, %v77
    %v156 = vadd.f32 %v47, %v82
    %v157 = vadd.f32 %v51, %v82
    %v158 = vadd.f32 %v55, %v82
    %v159 = vadd.f32 %v59, %v82
    %v160 = vadd.f32 %v47, %v87
    %v161 = vadd.f32 %v51, %v87
    %v162 = vadd.f32 %v55, %v87
    %v163 = vadd.f32 %v59, %v87
    %v164 = vadd.f32 %v47, %v92
    %v165 = vadd.f32 %v51, %v92
    %v166 = vadd.f32 %v55, %v92
    %v167 = vadd.f32 %v59, %v92
    %v168 = vadd.f32 %v47, %v97
    %v169 = vadd.f32 %v51, %v97
    %v170 = vadd.f32 %v55, %v97
    %v171 = vadd.f32 %v59, %v97
    %v172 = vadd.f32 %v47, %v102
    %v173 = vadd.f32 %v51, %v102
    %v174 = vadd.f32 %v55, %v102
    %v175 = vadd.f32 %v59, %v102
    %v176 = vadd.f32 %v47, %v107
    %v177 = vadd.f32 %v51, %v107
    %v178 = vadd.f32 %v55, %v107
    %v179 = vadd.f32 %v59, %v107
    %v180 = vadd.f32 %v47, %v112
    %v181 = vadd.f32 %v51, %v112
    %v182 = vadd.f32 %v55, %v112
    %v183 = vadd.f32 %v59, %v112
    %v184 = vadd.f32 %v47, %v117
    %v185 = vadd.f32 %v51, %v117
    %v186 = vadd.f32 %v55, %v117
    %v187 = vadd.f32 %v59, %v117
    %v188 = vadd.f32 %v47, %v122
    %v189 = vadd.f32 %v51, %v122
    %v190 = vadd.f32 %v55, %v122
    %v191 = vadd.f32 %v59, %v122
    %v192 = vadd.f32 %v47, %v127
    %v193 = vadd.f32 %v51, %v127
    %v194 = vadd.f32 %v55, %v127
    %v195 = vadd.f32 %v59, %v127
    %v196 = vadd.f32 %v47, %v132
    %v197 = vadd.f32 %v51, %v132
    %v198 = vadd.f32 %v55, %v132
    %v199 = vadd.f32 %v59, %v132
    %v200 = vadd.f32 %v47, %v137
    %v201 = vadd.f32 %v51, %v137
    %v202 = vadd.f32 %v55, %v137
    %v203 = vadd.f32 %v59, %v137
    %v204 = vadd.f32 %v47, %v142
    %v205 = vadd.f32 %v51, %v142
    %v206 = vadd.f32 %v55, %v142
    %v207 = vadd.f32 %v59, %v142
    %v208 = vld [vmem:[%s2] sm:$0xff]
    %v209 = vld [vmem:[%s2 + $0x8] sm:$0xff]
    %v210 = vld [vmem:[%s2 + $0x10] sm:$0xff]
    %v211 = vld [vmem:[%s2 + $0x18] sm:$0xff]
    %v212 = vld [vmem:[%s2 + $0x20] sm:$0xff]
    %v213 = vld [vmem:[%s2 + $0x28] sm:$0xff]
    %v214 = vld [vmem:[%s2 + $0x30] sm:$0xff]
    %v215 = vld [vmem:[%s2 + $0x38] sm:$0xff]
    %v216 = vld [vmem:[%s2 + $0x40] sm:$0xff]
    %v217 = vld [vmem:[%s2 + $0x48] sm:$0xff]
    %v218 = vld [vmem:[%s2 + $0x50] sm:$0xff]
    %v219 = vld [vmem:[%s2 + $0x58] sm:$0xff]
    %v220 = vld [vmem:[%s2 + $0x60] sm:$0xff]
    %v221 = vld [vmem:[%s2 + $0x68] sm:$0xff]
    %v222 = vld [vmem:[%s2 + $0x70] sm:$0xff]
    %v223 = vld [vmem:[%s2 + $0x78] sm:$0xff]
    %225 = vset.pattern.permute.xlu0 0
    %226 = vperm.xlu0 %225, %v208
    %v227 = vpop.permute.xlu0 %226
    %230 = vset.pattern.permute.xlu0 0
    %231 = vperm.xlu0 %230, %v209
    %v232 = vpop.permute.xlu0 %231
    %235 = vset.pattern.permute.xlu0 0
    %236 = vperm.xlu0 %235, %v210
    %v237 = vpop.permute.xlu0 %236
    %240 = vset.pattern.permute.xlu0 0
    %241 = vperm.xlu0 %240, %v211
    %v242 = vpop.permute.xlu0 %241
    %245 = vset.pattern.permute.xlu0 0
    %246 = vperm.xlu0 %245, %v212
    %v247 = vpop.permute.xlu0 %246
    %250 = vset.pattern.permute.xlu0 0
    %251 = vperm.xlu0 %250, %v213
    %v252 = vpop.permute.xlu0 %251
    %255 = vset.pattern.permute.xlu0 0
    %256 = vperm.xlu0 %255, %v214
    %v257 = vpop.permute.xlu0 %256
    %260 = vset.pattern.permute.xlu0 0
    %261 = vperm.xlu0 %260, %v215
    %v262 = vpop.permute.xlu0 %261
    %265 = vset.pattern.permute.xlu0 0
    %266 = vperm.xlu0 %265, %v216
    %v267 = vpop.permute.xlu0 %266
    %270 = vset.pattern.permute.xlu0 0
    %271 = vperm.xlu0 %270, %v217
    %v272 = vpop.permute.xlu0 %271
    %275 = vset.pattern.permute.xlu0 0
    %276 = vperm.xlu0 %275, %v218
    %v277 = vpop.permute.xlu0 %276
    %280 = vset.pattern.permute.xlu0 0
    %281 = vperm.xlu0 %280, %v219
    %v282 = vpop.permute.xlu0 %281
    %285 = vset.pattern.permute.xlu0 0
    %286 = vperm.xlu0 %285, %v220
    %v287 = vpop.permute.xlu0 %286
    %290 = vset.pattern.permute.xlu0 0
    %291 = vperm.xlu0 %290, %v221
    %v292 = vpop.permute.xlu0 %291
    %295 = vset.pattern.permute.xlu0 0
    %296 = vperm.xlu0 %295, %v222
    %v297 = vpop.permute.xlu0 %296
    %300 = vset.pattern.permute.xlu0 0
    %301 = vperm.xlu0 %300, %v223
    %v302 = vpop.permute.xlu0 %301
    %v304 = vmul.f32 %v144, %v227
    %v305 = vmul.f32 %v145, %v227
    %v306 = vmul.f32 %v146, %v227
    %v307 = vmul.f32 %v147, %v227
    %v308 = vmul.f32 %v148, %v232
    %v309 = vmul.f32 %v149, %v232
    %v310 = vmul.f32 %v150, %v232
    %v311 = vmul.f32 %v151, %v232
    %v312 = vmul.f32 %v152, %v237
    %v313 = vmul.f32 %v153, %v237
    %v314 = vmul.f32 %v154, %v237
    %v315 = vmul.f32 %v155, %v237
    %v316 = vmul.f32 %v156, %v242
    %v317 = vmul.f32 %v157, %v242
    %v318 = vmul.f32 %v158, %v242
    %v319 = vmul.f32 %v159, %v242
    %v320 = vmul.f32 %v160, %v247
    %v321 = vmul.f32 %v161, %v247
    %v322 = vmul.f32 %v162, %v247
    %v323 = vmul.f32 %v163, %v247
    %v324 = vmul.f32 %v164, %v252
    %v325 = vmul.f32 %v165, %v252
    %v326 = vmul.f32 %v166, %v252
    %v327 = vmul.f32 %v167, %v252
    %v328 = vmul.f32 %v168, %v257
    %v329 = vmul.f32 %v169, %v257
    %v330 = vmul.f32 %v170, %v257
    %v331 = vmul.f32 %v171, %v257
    %v332 = vmul.f32 %v172, %v262
    %v333 = vmul.f32 %v173, %v262
    %v334 = vmul.f32 %v174, %v262
    %v335 = vmul.f32 %v175, %v262
    %v336 = vmul.f32 %v176, %v267
    %v337 = vmul.f32 %v177, %v267
    %v338 = vmul.f32 %v178, %v267
    %v339 = vmul.f32 %v179, %v267
    %v340 = vmul.f32 %v180, %v272
    %v341 = vmul.f32 %v181, %v272
    %v342 = vmul.f32 %v182, %v272
    %v343 = vmul.f32 %v183, %v272
    %v344 = vmul.f32 %v184, %v277
    %v345 = vmul.f32 %v185, %v277
    %v346 = vmul.f32 %v186, %v277
    %v347 = vmul.f32 %v187, %v277
    %v348 = vmul.f32 %v188, %v282
    %v349 = vmul.f32 %v189, %v282
    %v350 = vmul.f32 %v190, %v282
    %v351 = vmul.f32 %v191, %v282
    %v352 = vmul.f32 %v192, %v287
    %v353 = vmul.f32 %v193, %v287
    %v354 = vmul.f32 %v194, %v287
    %v355 = vmul.f32 %v195, %v287
    %v356 = vmul.f32 %v196, %v292
    %v357 = vmul.f32 %v197, %v292
    %v358 = vmul.f32 %v198, %v292
    %v359 = vmul.f32 %v199, %v292
    %v360 = vmul.f32 %v200, %v297
    %v361 = vmul.f32 %v201, %v297
    %v362 = vmul.f32 %v202, %v297
    %v363 = vmul.f32 %v203, %v297
    %v364 = vmul.f32 %v204, %v302
    %v365 = vmul.f32 %v205, %v302
    %v366 = vmul.f32 %v206, %v302
    %v367 = vmul.f32 %v207, %v302
    %v368 = vxor.u32 %v304, 2147483648
    %v369 = vxor.u32 %v305, 2147483648
    %v370 = vxor.u32 %v306, 2147483648
    %v371 = vxor.u32 %v307, 2147483648
    %v372 = vxor.u32 %v308, 2147483648
    %v373 = vxor.u32 %v309, 2147483648
    %v374 = vxor.u32 %v310, 2147483648
    %v375 = vxor.u32 %v311, 2147483648
    %v376 = vxor.u32 %v312, 2147483648
    %v377 = vxor.u32 %v313, 2147483648
    %v378 = vxor.u32 %v314, 2147483648
    %v379 = vxor.u32 %v315, 2147483648
    %v380 = vxor.u32 %v316, 2147483648
    %v381 = vxor.u32 %v317, 2147483648
    %v382 = vxor.u32 %v318, 2147483648
    %v383 = vxor.u32 %v319, 2147483648
    %v384 = vxor.u32 %v320, 2147483648
    %v385 = vxor.u32 %v321, 2147483648
    %v386 = vxor.u32 %v322, 2147483648
    %v387 = vxor.u32 %v323, 2147483648
    %v388 = vxor.u32 %v324, 2147483648
    %v389 = vxor.u32 %v325, 2147483648
    %v390 = vxor.u32 %v326, 2147483648
    %v391 = vxor.u32 %v327, 2147483648
    %v392 = vxor.u32 %v328, 2147483648
    %v393 = vxor.u32 %v329, 2147483648
    %v394 = vxor.u32 %v330, 2147483648
    %v395 = vxor.u32 %v331, 2147483648
    %v396 = vxor.u32 %v332, 2147483648
    %v397 = vxor.u32 %v333, 2147483648
    %v398 = vxor.u32 %v334, 2147483648
    %v399 = vxor.u32 %v335, 2147483648
    %v400 = vxor.u32 %v336, 2147483648
    %v401 = vxor.u32 %v337, 2147483648
    %v402 = vxor.u32 %v338, 2147483648
    %v403 = vxor.u32 %v339, 2147483648
    %v404 = vxor.u32 %v340, 2147483648
    %v405 = vxor.u32 %v341, 2147483648
    %v406 = vxor.u32 %v342, 2147483648
    %v407 = vxor.u32 %v343, 2147483648
    %v408 = vxor.u32 %v344, 2147483648
    %v409 = vxor.u32 %v345, 2147483648
    %v410 = vxor.u32 %v346, 2147483648
    %v411 = vxor.u32 %v347, 2147483648
    %v412 = vxor.u32 %v348, 2147483648
    %v413 = vxor.u32 %v349, 2147483648
    %v414 = vxor.u32 %v350, 2147483648
    %v415 = vxor.u32 %v351, 2147483648
    %v416 = vxor.u32 %v352, 2147483648
    %v417 = vxor.u32 %v353, 2147483648
    %v418 = vxor.u32 %v354, 2147483648
    %v419 = vxor.u32 %v355, 2147483648
    %v420 = vxor.u32 %v356, 2147483648
    %v421 = vxor.u32 %v357, 2147483648
    %v422 = vxor.u32 %v358, 2147483648
    %v423 = vxor.u32 %v359, 2147483648
    %v424 = vxor.u32 %v360, 2147483648
    %v425 = vxor.u32 %v361, 2147483648
    %v426 = vxor.u32 %v362, 2147483648
    %v427 = vxor.u32 %v363, 2147483648
    %v428 = vxor.u32 %v364, 2147483648
    %v429 = vxor.u32 %v365, 2147483648
    %v430 = vxor.u32 %v366, 2147483648
    %v431 = vxor.u32 %v367, 2147483648
    %v432 = vmul.f32 %v368, 1.442695
    %v433 = vpow.pop %v432
    %v434 = vmul.f32 %v369, 1.442695
    %v435 = vpow.pop %v434
    %v436 = vmul.f32 %v370, 1.442695
    %v437 = vpow.pop %v436
    %v438 = vmul.f32 %v371, 1.442695
    %v439 = vpow.pop %v438
    %v440 = vmul.f32 %v372, 1.442695
    %v441 = vpow.pop %v440
    %v442 = vmul.f32 %v373, 1.442695
    %v443 = vpow.pop %v442
    %v444 = vmul.f32 %v374, 1.442695
    %v445 = vpow.pop %v444
    %v446 = vmul.f32 %v375, 1.442695
    %v447 = vpow.pop %v446
    %v448 = vmul.f32 %v376, 1.442695
    %v449 = vpow.pop %v448
    %v450 = vmul.f32 %v377, 1.442695
    %v451 = vpow.pop %v450
    %v452 = vmul.f32 %v378, 1.442695
    %v453 = vpow.pop %v452
    %v454 = vmul.f32 %v379, 1.442695
    %v455 = vpow.pop %v454
    %v456 = vmul.f32 %v380, 1.442695
    %v457 = vpow.pop %v456
    %v458 = vmul.f32 %v381, 1.442695
    %v459 = vpow.pop %v458
    %v460 = vmul.f32 %v382, 1.442695
    %v461 = vpow.pop %v460
    %v462 = vmul.f32 %v383, 1.442695
    %v463 = vpow.pop %v462
    %v464 = vmul.f32 %v384, 1.442695
    %v465 = vpow.pop %v464
    %v466 = vmul.f32 %v385, 1.442695
    %v467 = vpow.pop %v466
    %v468 = vmul.f32 %v386, 1.442695
    %v469 = vpow.pop %v468
    %v470 = vmul.f32 %v387, 1.442695
    %v471 = vpow.pop %v470
    %v472 = vmul.f32 %v388, 1.442695
    %v473 = vpow.pop %v472
    %v474 = vmul.f32 %v389, 1.442695
    %v475 = vpow.pop %v474
    %v476 = vmul.f32 %v390, 1.442695
    %v477 = vpow.pop %v476
    %v478 = vmul.f32 %v391, 1.442695
    %v479 = vpow.pop %v478
    %v480 = vmul.f32 %v392, 1.442695
    %v481 = vpow.pop %v480
    %v482 = vmul.f32 %v393, 1.442695
    %v483 = vpow.pop %v482
    %v484 = vmul.f32 %v394, 1.442695
    %v485 = vpow.pop %v484
    %v486 = vmul.f32 %v395, 1.442695
    %v487 = vpow.pop %v486
    %v488 = vmul.f32 %v396, 1.442695
    %v489 = vpow.pop %v488
    %v490 = vmul.f32 %v397, 1.442695
    %v491 = vpow.pop %v490
    %v492 = vmul.f32 %v398, 1.442695
    %v493 = vpow.pop %v492
    %v494 = vmul.f32 %v399, 1.442695
    %v495 = vpow.pop %v494
    %v496 = vmul.f32 %v400, 1.442695
    %v497 = vpow.pop %v496
    %v498 = vmul.f32 %v401, 1.442695
    %v499 = vpow.pop %v498
    %v500 = vmul.f32 %v402, 1.442695
    %v501 = vpow.pop %v500
    %v502 = vmul.f32 %v403, 1.442695
    %v503 = vpow.pop %v502
    %v504 = vmul.f32 %v404, 1.442695
    %v505 = vpow.pop %v504
    %v506 = vmul.f32 %v405, 1.442695
    %v507 = vpow.pop %v506
    %v508 = vmul.f32 %v406, 1.442695
    %v509 = vpow.pop %v508
    %v510 = vmul.f32 %v407, 1.442695
    %v511 = vpow.pop %v510
    %v512 = vmul.f32 %v408, 1.442695
    %v513 = vpow.pop %v512
    %v514 = vmul.f32 %v409, 1.442695
    %v515 = vpow.pop %v514
    %v516 = vmul.f32 %v410, 1.442695
    %v517 = vpow.pop %v516
    %v518 = vmul.f32 %v411, 1.442695
    %v519 = vpow.pop %v518
    %v520 = vmul.f32 %v412, 1.442695
    %v521 = vpow.pop %v520
    %v522 = vmul.f32 %v413, 1.442695
    %v523 = vpow.pop %v522
    %v524 = vmul.f32 %v414, 1.442695
    %v525 = vpow.pop %v524
    %v526 = vmul.f32 %v415, 1.442695
    %v527 = vpow.pop %v526
    %v528 = vmul.f32 %v416, 1.442695
    %v529 = vpow.pop %v528
    %v530 = vmul.f32 %v417, 1.442695
    %v531 = vpow.pop %v530
    %v532 = vmul.f32 %v418, 1.442695
    %v533 = vpow.pop %v532
    %v534 = vmul.f32 %v419, 1.442695
    %v535 = vpow.pop %v534
    %v536 = vmul.f32 %v420, 1.442695
    %v537 = vpow.pop %v536
    %v538 = vmul.f32 %v421, 1.442695
    %v539 = vpow.pop %v538
    %v540 = vmul.f32 %v422, 1.442695
    %v541 = vpow.pop %v540
    %v542 = vmul.f32 %v423, 1.442695
    %v543 = vpow.pop %v542
    %v544 = vmul.f32 %v424, 1.442695
    %v545 = vpow.pop %v544
    %v546 = vmul.f32 %v425, 1.442695
    %v547 = vpow.pop %v546
    %v548 = vmul.f32 %v426, 1.442695
    %v549 = vpow.pop %v548
    %v550 = vmul.f32 %v427, 1.442695
    %v551 = vpow.pop %v550
    %v552 = vmul.f32 %v428, 1.442695
    %v553 = vpow.pop %v552
    %v554 = vmul.f32 %v429, 1.442695
    %v555 = vpow.pop %v554
    %v556 = vmul.f32 %v430, 1.442695
    %v557 = vpow.pop %v556
    %v558 = vmul.f32 %v431, 1.442695
    %v559 = vpow.pop %v558
    %v560 = vadd.f32 %v433, 1.0
    %v561 = vadd.f32 %v435, 1.0
    %v562 = vadd.f32 %v437, 1.0
    %v563 = vadd.f32 %v439, 1.0
    %v564 = vadd.f32 %v441, 1.0
    %v565 = vadd.f32 %v443, 1.0
    %v566 = vadd.f32 %v445, 1.0
    %v567 = vadd.f32 %v447, 1.0
    %v568 = vadd.f32 %v449, 1.0
    %v569 = vadd.f32 %v451, 1.0
    %v570 = vadd.f32 %v453, 1.0
    %v571 = vadd.f32 %v455, 1.0
    %v572 = vadd.f32 %v457, 1.0
    %v573 = vadd.f32 %v459, 1.0
    %v574 = vadd.f32 %v461, 1.0
    %v575 = vadd.f32 %v463, 1.0
    %v576 = vadd.f32 %v465, 1.0
    %v577 = vadd.f32 %v467, 1.0
    %v578 = vadd.f32 %v469, 1.0
    %v579 = vadd.f32 %v471, 1.0
    %v580 = vadd.f32 %v473, 1.0
    %v581 = vadd.f32 %v475, 1.0
    %v582 = vadd.f32 %v477, 1.0
    %v583 = vadd.f32 %v479, 1.0
    %v584 = vadd.f32 %v481, 1.0
    %v585 = vadd.f32 %v483, 1.0
    %v586 = vadd.f32 %v485, 1.0
    %v587 = vadd.f32 %v487, 1.0
    %v588 = vadd.f32 %v489, 1.0
    %v589 = vadd.f32 %v491, 1.0
    %v590 = vadd.f32 %v493, 1.0
    %v591 = vadd.f32 %v495, 1.0
    %v592 = vadd.f32 %v497, 1.0
    %v593 = vadd.f32 %v499, 1.0
    %v594 = vadd.f32 %v501, 1.0
    %v595 = vadd.f32 %v503, 1.0
    %v596 = vadd.f32 %v505, 1.0
    %v597 = vadd.f32 %v507, 1.0
    %v598 = vadd.f32 %v509, 1.0
    %v599 = vadd.f32 %v511, 1.0
    %v600 = vadd.f32 %v513, 1.0
    %v601 = vadd.f32 %v515, 1.0
    %v602 = vadd.f32 %v517, 1.0
    %v603 = vadd.f32 %v519, 1.0
    %v604 = vadd.f32 %v521, 1.0
    %v605 = vadd.f32 %v523, 1.0
    %v606 = vadd.f32 %v525, 1.0
    %v607 = vadd.f32 %v527, 1.0
    %v608 = vadd.f32 %v529, 1.0
    %v609 = vadd.f32 %v531, 1.0
    %v610 = vadd.f32 %v533, 1.0
    %v611 = vadd.f32 %v535, 1.0
    %v612 = vadd.f32 %v537, 1.0
    %v613 = vadd.f32 %v539, 1.0
    %v614 = vadd.f32 %v541, 1.0
    %v615 = vadd.f32 %v543, 1.0
    %v616 = vadd.f32 %v545, 1.0
    %v617 = vadd.f32 %v547, 1.0
    %v618 = vadd.f32 %v549, 1.0
    %v619 = vadd.f32 %v551, 1.0
    %v620 = vadd.f32 %v553, 1.0
    %v621 = vadd.f32 %v555, 1.0
    %v622 = vadd.f32 %v557, 1.0
    %v623 = vadd.f32 %v559, 1.0
    %v624 = vrcp.pop %v560
    %v625 = vmul.f32 1.0, %v624
    %v626 = vrcp.pop %v561
    %v627 = vmul.f32 1.0, %v626
    %v628 = vrcp.pop %v562
    %v629 = vmul.f32 1.0, %v628
    %v630 = vrcp.pop %v563
    %v631 = vmul.f32 1.0, %v630
    %v632 = vrcp.pop %v564
    %v633 = vmul.f32 1.0, %v632
    %v634 = vrcp.pop %v565
    %v635 = vmul.f32 1.0, %v634
    %v636 = vrcp.pop %v566
    %v637 = vmul.f32 1.0, %v636
    %v638 = vrcp.pop %v567
    %v639 = vmul.f32 1.0, %v638
    %v640 = vrcp.pop %v568
    %v641 = vmul.f32 1.0, %v640
    %v642 = vrcp.pop %v569
    %v643 = vmul.f32 1.0, %v642
    %v644 = vrcp.pop %v570
    %v645 = vmul.f32 1.0, %v644
    %v646 = vrcp.pop %v571
    %v647 = vmul.f32 1.0, %v646
    %v648 = vrcp.pop %v572
    %v649 = vmul.f32 1.0, %v648
    %v650 = vrcp.pop %v573
    %v651 = vmul.f32 1.0, %v650
    %v652 = vrcp.pop %v574
    %v653 = vmul.f32 1.0, %v652
    %v654 = vrcp.pop %v575
    %v655 = vmul.f32 1.0, %v654
    %v656 = vrcp.pop %v576
    %v657 = vmul.f32 1.0, %v656
    %v658 = vrcp.pop %v577
    %v659 = vmul.f32 1.0, %v658
    %v660 = vrcp.pop %v578
    %v661 = vmul.f32 1.0, %v660
    %v662 = vrcp.pop %v579
    %v663 = vmul.f32 1.0, %v662
    %v664 = vrcp.pop %v580
    %v665 = vmul.f32 1.0, %v664
    %v666 = vrcp.pop %v581
    %v667 = vmul.f32 1.0, %v666
    %v668 = vrcp.pop %v582
    %v669 = vmul.f32 1.0, %v668
    %v670 = vrcp.pop %v583
    %v671 = vmul.f32 1.0, %v670
    %v672 = vrcp.pop %v584
    %v673 = vmul.f32 1.0, %v672
    %v674 = vrcp.pop %v585
    %v675 = vmul.f32 1.0, %v674
    %v676 = vrcp.pop %v586
    %v677 = vmul.f32 1.0, %v676
    %v678 = vrcp.pop %v587
    %v679 = vmul.f32 1.0, %v678
    %v680 = vrcp.pop %v588
    %v681 = vmul.f32 1.0, %v680
    %v682 = vrcp.pop %v589
    %v683 = vmul.f32 1.0, %v682
    %v684 = vrcp.pop %v590
    %v685 = vmul.f32 1.0, %v684
    %v686 = vrcp.pop %v591
    %v687 = vmul.f32 1.0, %v686
    %v688 = vrcp.pop %v592
    %v689 = vmul.f32 1.0, %v688
    %v690 = vrcp.pop %v593
    %v691 = vmul.f32 1.0, %v690
    %v692 = vrcp.pop %v594
    %v693 = vmul.f32 1.0, %v692
    %v694 = vrcp.pop %v595
    %v695 = vmul.f32 1.0, %v694
    %v696 = vrcp.pop %v596
    %v697 = vmul.f32 1.0, %v696
    %v698 = vrcp.pop %v597
    %v699 = vmul.f32 1.0, %v698
    %v700 = vrcp.pop %v598
    %v701 = vmul.f32 1.0, %v700
    %v702 = vrcp.pop %v599
    %v703 = vmul.f32 1.0, %v702
    %v704 = vrcp.pop %v600
    %v705 = vmul.f32 1.0, %v704
    %v706 = vrcp.pop %v601
    %v707 = vmul.f32 1.0, %v706
    %v708 = vrcp.pop %v602
    %v709 = vmul.f32 1.0, %v708
    %v710 = vrcp.pop %v603
    %v711 = vmul.f32 1.0, %v710
    %v712 = vrcp.pop %v604
    %v713 = vmul.f32 1.0, %v712
    %v714 = vrcp.pop %v605
    %v715 = vmul.f32 1.0, %v714
    %v716 = vrcp.pop %v606
    %v717 = vmul.f32 1.0, %v716
    %v718 = vrcp.pop %v607
    %v719 = vmul.f32 1.0, %v718
    %v720 = vrcp.pop %v608
    %v721 = vmul.f32 1.0, %v720
    %v722 = vrcp.pop %v609
    %v723 = vmul.f32 1.0, %v722
    %v724 = vrcp.pop %v610
    %v725 = vmul.f32 1.0, %v724
    %v726 = vrcp.pop %v611
    %v727 = vmul.f32 1.0, %v726
    %v728 = vrcp.pop %v612
    %v729 = vmul.f32 1.0, %v728
    %v730 = vrcp.pop %v613
    %v731 = vmul.f32 1.0, %v730
    %v732 = vrcp.pop %v614
    %v733 = vmul.f32 1.0, %v732
    %v734 = vrcp.pop %v615
    %v735 = vmul.f32 1.0, %v734
    %v736 = vrcp.pop %v616
    %v737 = vmul.f32 1.0, %v736
    %v738 = vrcp.pop %v617
    %v739 = vmul.f32 1.0, %v738
    %v740 = vrcp.pop %v618
    %v741 = vmul.f32 1.0, %v740
    %v742 = vrcp.pop %v619
    %v743 = vmul.f32 1.0, %v742
    %v744 = vrcp.pop %v620
    %v745 = vmul.f32 1.0, %v744
    %v746 = vrcp.pop %v621
    %v747 = vmul.f32 1.0, %v746
    %v748 = vrcp.pop %v622
    %v749 = vmul.f32 1.0, %v748
    %v750 = vrcp.pop %v623
    %v751 = vmul.f32 1.0, %v750
    %v752 = vadd.f32 %v625, %v633
    %v753 = vadd.f32 %v752, %v641
    %v754 = vadd.f32 %v753, %v649
    %v755 = vadd.f32 %v754, %v657
    %v756 = vadd.f32 %v755, %v665
    %v757 = vadd.f32 %v756, %v673
    %v758 = vadd.f32 %v757, %v681
    %v759 = vadd.f32 %v758, %v689
    %v760 = vadd.f32 %v759, %v697
    %v761 = vadd.f32 %v760, %v705
    %v762 = vadd.f32 %v761, %v713
    %v763 = vadd.f32 %v762, %v721
    %v764 = vadd.f32 %v763, %v729
    %v765 = vadd.f32 %v764, %v737
    %v766 = vadd.f32 %v765, %v745
    %v767 = vrot.slane %v766, 4
    %v768 = vadd.f32 %v766, %v767
    %v769 = vrot.slane %v768, 2
    %v770 = vadd.f32 %v768, %v769
    %v771 = vrot.slane %v770, 1
    %v772 = vadd.f32 %v770, %v771
    %v773 = vadd.f32 %v627, %v635
    %v774 = vadd.f32 %v773, %v643
    %v775 = vadd.f32 %v774, %v651
    %v776 = vadd.f32 %v775, %v659
    %v777 = vadd.f32 %v776, %v667
    %v778 = vadd.f32 %v777, %v675
    %v779 = vadd.f32 %v778, %v683
    %v780 = vadd.f32 %v779, %v691
    %v781 = vadd.f32 %v780, %v699
    %v782 = vadd.f32 %v781, %v707
    %v783 = vadd.f32 %v782, %v715
    %v784 = vadd.f32 %v783, %v723
    %v785 = vadd.f32 %v784, %v731
    %v786 = vadd.f32 %v785, %v739
    %v787 = vadd.f32 %v786, %v747
    %v788 = vrot.slane %v787, 4
    %v789 = vadd.f32 %v787, %v788
    %v790 = vrot.slane %v789, 2
    %v791 = vadd.f32 %v789, %v790
    %v792 = vrot.slane %v791, 1
    %v793 = vadd.f32 %v791, %v792
    %v794 = vadd.f32 %v629, %v637
    %v795 = vadd.f32 %v794, %v645
    %v796 = vadd.f32 %v795, %v653
    %v797 = vadd.f32 %v796, %v661
    %v798 = vadd.f32 %v797, %v669
    %v799 = vadd.f32 %v798, %v677
    %v800 = vadd.f32 %v799, %v685
    %v801 = vadd.f32 %v800, %v693
    %v802 = vadd.f32 %v801, %v701
    %v803 = vadd.f32 %v802, %v709
    %v804 = vadd.f32 %v803, %v717
    %v805 = vadd.f32 %v804, %v725
    %v806 = vadd.f32 %v805, %v733
    %v807 = vadd.f32 %v806, %v741
    %v808 = vadd.f32 %v807, %v749
    %v809 = vrot.slane %v808, 4
    %v810 = vadd.f32 %v808, %v809
    %v811 = vrot.slane %v810, 2
    %v812 = vadd.f32 %v810, %v811
    %v813 = vrot.slane %v812, 1
    %v814 = vadd.f32 %v812, %v813
    %v815 = vadd.f32 %v631, %v639
    %v816 = vadd.f32 %v815, %v647
    %v817 = vadd.f32 %v816, %v655
    %v818 = vadd.f32 %v817, %v663
    %v819 = vadd.f32 %v818, %v671
    %v820 = vadd.f32 %v819, %v679
    %v821 = vadd.f32 %v820, %v687
    %v822 = vadd.f32 %v821, %v695
    %v823 = vadd.f32 %v822, %v703
    %v824 = vadd.f32 %v823, %v711
    %v825 = vadd.f32 %v824, %v719
    %v826 = vadd.f32 %v825, %v727
    %v827 = vadd.f32 %v826, %v735
    %v828 = vadd.f32 %v827, %v743
    %v829 = vadd.f32 %v828, %v751
    %v830 = vrot.slane %v829, 4
    %v831 = vadd.f32 %v829, %v830
    %v832 = vrot.slane %v831, 2
    %v833 = vadd.f32 %v831, %v832
    %v834 = vrot.slane %v833, 1
    %v835 = vadd.f32 %v833, %v834
    %v836 = vmul.f32 %v772, 0.0078125
    %v837 = vmul.f32 %v793, 0.0078125
    %v838 = vmul.f32 %v814, 0.0078125
    %v839 = vmul.f32 %v835, 0.0078125
    %v840 = vld [vmem:[%s3] sm:$0xff]
    %v841 = vld [vmem:[%s3 + $0x8] sm:$0xff]
    %v842 = vld [vmem:[%s3 + $0x10] sm:$0xff]
    %v843 = vld [vmem:[%s3 + $0x18] sm:$0xff]
    %v844 = vld [vmem:[%s3 + $0x20] sm:$0xff]
    %v845 = vld [vmem:[%s3 + $0x28] sm:$0xff]
    %v846 = vld [vmem:[%s3 + $0x30] sm:$0xff]
    %v847 = vld [vmem:[%s3 + $0x38] sm:$0xff]
    %v848 = vld [vmem:[%s3 + $0x40] sm:$0xff]
    %v849 = vld [vmem:[%s3 + $0x48] sm:$0xff]
    %v850 = vld [vmem:[%s3 + $0x50] sm:$0xff]
    %v851 = vld [vmem:[%s3 + $0x58] sm:$0xff]
    %v852 = vld [vmem:[%s3 + $0x60] sm:$0xff]
    %v853 = vld [vmem:[%s3 + $0x68] sm:$0xff]
    %v854 = vld [vmem:[%s3 + $0x70] sm:$0xff]
    %v855 = vld [vmem:[%s3 + $0x78] sm:$0xff]
    %857 = vset.pattern.permute.xlu0 0
    %858 = vperm.xlu0 %857, %v840
    %v859 = vpop.permute.xlu0 %858
    %862 = vset.pattern.permute.xlu0 0
    %863 = vperm.xlu0 %862, %v841
    %v864 = vpop.permute.xlu0 %863
    %867 = vset.pattern.permute.xlu0 0
    %868 = vperm.xlu0 %867, %v842
    %v869 = vpop.permute.xlu0 %868
    %872 = vset.pattern.permute.xlu0 0
    %873 = vperm.xlu0 %872, %v843
    %v874 = vpop.permute.xlu0 %873
    %877 = vset.pattern.permute.xlu0 0
    %878 = vperm.xlu0 %877, %v844
    %v879 = vpop.permute.xlu0 %878
    %882 = vset.pattern.permute.xlu0 0
    %883 = vperm.xlu0 %882, %v845
    %v884 = vpop.permute.xlu0 %883
    %887 = vset.pattern.permute.xlu0 0
    %888 = vperm.xlu0 %887, %v846
    %v889 = vpop.permute.xlu0 %888
    %892 = vset.pattern.permute.xlu0 0
    %893 = vperm.xlu0 %892, %v847
    %v894 = vpop.permute.xlu0 %893
    %897 = vset.pattern.permute.xlu0 0
    %898 = vperm.xlu0 %897, %v848
    %v899 = vpop.permute.xlu0 %898
    %902 = vset.pattern.permute.xlu0 0
    %903 = vperm.xlu0 %902, %v849
    %v904 = vpop.permute.xlu0 %903
    %907 = vset.pattern.permute.xlu0 0
    %908 = vperm.xlu0 %907, %v850
    %v909 = vpop.permute.xlu0 %908
    %912 = vset.pattern.permute.xlu0 0
    %913 = vperm.xlu0 %912, %v851
    %v914 = vpop.permute.xlu0 %913
    %917 = vset.pattern.permute.xlu0 0
    %918 = vperm.xlu0 %917, %v852
    %v919 = vpop.permute.xlu0 %918
    %922 = vset.pattern.permute.xlu0 0
    %923 = vperm.xlu0 %922, %v853
    %v924 = vpop.permute.xlu0 %923
    %927 = vset.pattern.permute.xlu0 0
    %928 = vperm.xlu0 %927, %v854
    %v929 = vpop.permute.xlu0 %928
    %932 = vset.pattern.permute.xlu0 0
    %933 = vperm.xlu0 %932, %v855
    %v934 = vpop.permute.xlu0 %933
    %v936 = vadd.f32 %v47, %v859
    %v937 = vadd.f32 %v51, %v859
    %v938 = vadd.f32 %v55, %v859
    %v939 = vadd.f32 %v59, %v859
    %v940 = vadd.f32 %v47, %v864
    %v941 = vadd.f32 %v51, %v864
    %v942 = vadd.f32 %v55, %v864
    %v943 = vadd.f32 %v59, %v864
    %v944 = vadd.f32 %v47, %v869
    %v945 = vadd.f32 %v51, %v869
    %v946 = vadd.f32 %v55, %v869
    %v947 = vadd.f32 %v59, %v869
    %v948 = vadd.f32 %v47, %v874
    %v949 = vadd.f32 %v51, %v874
    %v950 = vadd.f32 %v55, %v874
    %v951 = vadd.f32 %v59, %v874
    %v952 = vadd.f32 %v47, %v879
    %v953 = vadd.f32 %v51, %v879
    %v954 = vadd.f32 %v55, %v879
    %v955 = vadd.f32 %v59, %v879
    %v956 = vadd.f32 %v47, %v884
    %v957 = vadd.f32 %v51, %v884
    %v958 = vadd.f32 %v55, %v884
    %v959 = vadd.f32 %v59, %v884
    %v960 = vadd.f32 %v47, %v889
    %v961 = vadd.f32 %v51, %v889
    %v962 = vadd.f32 %v55, %v889
    %v963 = vadd.f32 %v59, %v889
    %v964 = vadd.f32 %v47, %v894
    %v965 = vadd.f32 %v51, %v894
    %v966 = vadd.f32 %v55, %v894
    %v967 = vadd.f32 %v59, %v894
    %v968 = vadd.f32 %v47, %v899
    %v969 = vadd.f32 %v51, %v899
    %v970 = vadd.f32 %v55, %v899
    %v971 = vadd.f32 %v59, %v899
    %v972 = vadd.f32 %v47, %v904
    %v973 = vadd.f32 %v51, %v904
    %v974 = vadd.f32 %v55, %v904
    %v975 = vadd.f32 %v59, %v904
    %v976 = vadd.f32 %v47, %v909
    %v977 = vadd.f32 %v51, %v909
    %v978 = vadd.f32 %v55, %v909
    %v979 = vadd.f32 %v59, %v909
    %v980 = vadd.f32 %v47, %v914
    %v981 = vadd.f32 %v51, %v914
    %v982 = vadd.f32 %v55, %v914
    %v983 = vadd.f32 %v59, %v914
    %v984 = vadd.f32 %v47, %v919
    %v985 = vadd.f32 %v51, %v919
    %v986 = vadd.f32 %v55, %v919
    %v987 = vadd.f32 %v59, %v919
    %v988 = vadd.f32 %v47, %v924
    %v989 = vadd.f32 %v51, %v924
    %v990 = vadd.f32 %v55, %v924
    %v991 = vadd.f32 %v59, %v924
    %v992 = vadd.f32 %v47, %v929
    %v993 = vadd.f32 %v51, %v929
    %v994 = vadd.f32 %v55, %v929
    %v995 = vadd.f32 %v59, %v929
    %v996 = vadd.f32 %v47, %v934
    %v997 = vadd.f32 %v51, %v934
    %v998 = vadd.f32 %v55, %v934
    %v999 = vadd.f32 %v59, %v934
    %v1000 = vld [vmem:[%s4] sm:$0xff]
    %v1001 = vld [vmem:[%s4 + $0x8] sm:$0xff]
    %v1002 = vld [vmem:[%s4 + $0x10] sm:$0xff]
    %v1003 = vld [vmem:[%s4 + $0x18] sm:$0xff]
    %v1004 = vld [vmem:[%s4 + $0x20] sm:$0xff]
    %v1005 = vld [vmem:[%s4 + $0x28] sm:$0xff]
    %v1006 = vld [vmem:[%s4 + $0x30] sm:$0xff]
    %v1007 = vld [vmem:[%s4 + $0x38] sm:$0xff]
    %v1008 = vld [vmem:[%s4 + $0x40] sm:$0xff]
    %v1009 = vld [vmem:[%s4 + $0x48] sm:$0xff]
    %v1010 = vld [vmem:[%s4 + $0x50] sm:$0xff]
    %v1011 = vld [vmem:[%s4 + $0x58] sm:$0xff]
    %v1012 = vld [vmem:[%s4 + $0x60] sm:$0xff]
    %v1013 = vld [vmem:[%s4 + $0x68] sm:$0xff]
    %v1014 = vld [vmem:[%s4 + $0x70] sm:$0xff]
    %v1015 = vld [vmem:[%s4 + $0x78] sm:$0xff]
    %1017 = vset.pattern.permute.xlu0 0
    %1018 = vperm.xlu0 %1017, %v1000
    %v1019 = vpop.permute.xlu0 %1018
    %1022 = vset.pattern.permute.xlu0 0
    %1023 = vperm.xlu0 %1022, %v1001
    %v1024 = vpop.permute.xlu0 %1023
    %1027 = vset.pattern.permute.xlu0 0
    %1028 = vperm.xlu0 %1027, %v1002
    %v1029 = vpop.permute.xlu0 %1028
    %1032 = vset.pattern.permute.xlu0 0
    %1033 = vperm.xlu0 %1032, %v1003
    %v1034 = vpop.permute.xlu0 %1033
    %1037 = vset.pattern.permute.xlu0 0
    %1038 = vperm.xlu0 %1037, %v1004
    %v1039 = vpop.permute.xlu0 %1038
    %1042 = vset.pattern.permute.xlu0 0
    %1043 = vperm.xlu0 %1042, %v1005
    %v1044 = vpop.permute.xlu0 %1043
    %1047 = vset.pattern.permute.xlu0 0
    %1048 = vperm.xlu0 %1047, %v1006
    %v1049 = vpop.permute.xlu0 %1048
    %1052 = vset.pattern.permute.xlu0 0
    %1053 = vperm.xlu0 %1052, %v1007
    %v1054 = vpop.permute.xlu0 %1053
    %1057 = vset.pattern.permute.xlu0 0
    %1058 = vperm.xlu0 %1057, %v1008
    %v1059 = vpop.permute.xlu0 %1058
    %1062 = vset.pattern.permute.xlu0 0
    %1063 = vperm.xlu0 %1062, %v1009
    %v1064 = vpop.permute.xlu0 %1063
    %1067 = vset.pattern.permute.xlu0 0
    %1068 = vperm.xlu0 %1067, %v1010
    %v1069 = vpop.permute.xlu0 %1068
    %1072 = vset.pattern.permute.xlu0 0
    %1073 = vperm.xlu0 %1072, %v1011
    %v1074 = vpop.permute.xlu0 %1073
    %1077 = vset.pattern.permute.xlu0 0
    %1078 = vperm.xlu0 %1077, %v1012
    %v1079 = vpop.permute.xlu0 %1078
    %1082 = vset.pattern.permute.xlu0 0
    %1083 = vperm.xlu0 %1082, %v1013
    %v1084 = vpop.permute.xlu0 %1083
    %1087 = vset.pattern.permute.xlu0 0
    %1088 = vperm.xlu0 %1087, %v1014
    %v1089 = vpop.permute.xlu0 %1088
    %1092 = vset.pattern.permute.xlu0 0
    %1093 = vperm.xlu0 %1092, %v1015
    %v1094 = vpop.permute.xlu0 %1093
    %v1096 = vmul.f32 %v936, %v1019
    %v1097 = vmul.f32 %v937, %v1019
    %v1098 = vmul.f32 %v938, %v1019
    %v1099 = vmul.f32 %v939, %v1019
    %v1100 = vmul.f32 %v940, %v1024
    %v1101 = vmul.f32 %v941, %v1024
    %v1102 = vmul.f32 %v942, %v1024
    %v1103 = vmul.f32 %v943, %v1024
    %v1104 = vmul.f32 %v944, %v1029
    %v1105 = vmul.f32 %v945, %v1029
    %v1106 = vmul.f32 %v946, %v1029
    %v1107 = vmul.f32 %v947, %v1029
    %v1108 = vmul.f32 %v948, %v1034
    %v1109 = vmul.f32 %v949, %v1034
    %v1110 = vmul.f32 %v950, %v1034
    %v1111 = vmul.f32 %v951, %v1034
    %v1112 = vmul.f32 %v952, %v1039
    %v1113 = vmul.f32 %v953, %v1039
    %v1114 = vmul.f32 %v954, %v1039
    %v1115 = vmul.f32 %v955, %v1039
    %v1116 = vmul.f32 %v956, %v1044
    %v1117 = vmul.f32 %v957, %v1044
    %v1118 = vmul.f32 %v958, %v1044
    %v1119 = vmul.f32 %v959, %v1044
    %v1120 = vmul.f32 %v960, %v1049
    %v1121 = vmul.f32 %v961, %v1049
    %v1122 = vmul.f32 %v962, %v1049
    %v1123 = vmul.f32 %v963, %v1049
    %v1124 = vmul.f32 %v964, %v1054
    %v1125 = vmul.f32 %v965, %v1054
    %v1126 = vmul.f32 %v966, %v1054
    %v1127 = vmul.f32 %v967, %v1054
    %v1128 = vmul.f32 %v968, %v1059
    %v1129 = vmul.f32 %v969, %v1059
    %v1130 = vmul.f32 %v970, %v1059
    %v1131 = vmul.f32 %v971, %v1059
    %v1132 = vmul.f32 %v972, %v1064
    %v1133 = vmul.f32 %v973, %v1064
    %v1134 = vmul.f32 %v974, %v1064
    %v1135 = vmul.f32 %v975, %v1064
    %v1136 = vmul.f32 %v976, %v1069
    %v1137 = vmul.f32 %v977, %v1069
    %v1138 = vmul.f32 %v978, %v1069
    %v1139 = vmul.f32 %v979, %v1069
    %v1140 = vmul.f32 %v980, %v1074
    %v1141 = vmul.f32 %v981, %v1074
    %v1142 = vmul.f32 %v982, %v1074
    %v1143 = vmul.f32 %v983, %v1074
    %v1144 = vmul.f32 %v984, %v1079
    %v1145 = vmul.f32 %v985, %v1079
    %v1146 = vmul.f32 %v986, %v1079
    %v1147 = vmul.f32 %v987, %v1079
    %v1148 = vmul.f32 %v988, %v1084
    %v1149 = vmul.f32 %v989, %v1084
    %v1150 = vmul.f32 %v990, %v1084
    %v1151 = vmul.f32 %v991, %v1084
    %v1152 = vmul.f32 %v992, %v1089
    %v1153 = vmul.f32 %v993, %v1089
    %v1154 = vmul.f32 %v994, %v1089
    %v1155 = vmul.f32 %v995, %v1089
    %v1156 = vmul.f32 %v996, %v1094
    %v1157 = vmul.f32 %v997, %v1094
    %v1158 = vmul.f32 %v998, %v1094
    %v1159 = vmul.f32 %v999, %v1094
    %v1160 = vxor.u32 %v1096, 2147483648
    %v1161 = vxor.u32 %v1097, 2147483648
    %v1162 = vxor.u32 %v1098, 2147483648
    %v1163 = vxor.u32 %v1099, 2147483648
    %v1164 = vxor.u32 %v1100, 2147483648
    %v1165 = vxor.u32 %v1101, 2147483648
    %v1166 = vxor.u32 %v1102, 2147483648
    %v1167 = vxor.u32 %v1103, 2147483648
    %v1168 = vxor.u32 %v1104, 2147483648
    %v1169 = vxor.u32 %v1105, 2147483648
    %v1170 = vxor.u32 %v1106, 2147483648
    %v1171 = vxor.u32 %v1107, 2147483648
    %v1172 = vxor.u32 %v1108, 2147483648
    %v1173 = vxor.u32 %v1109, 2147483648
    %v1174 = vxor.u32 %v1110, 2147483648
    %v1175 = vxor.u32 %v1111, 2147483648
    %v1176 = vxor.u32 %v1112, 2147483648
    %v1177 = vxor.u32 %v1113, 2147483648
    %v1178 = vxor.u32 %v1114, 2147483648
    %v1179 = vxor.u32 %v1115, 2147483648
    %v1180 = vxor.u32 %v1116, 2147483648
    %v1181 = vxor.u32 %v1117, 2147483648
    %v1182 = vxor.u32 %v1118, 2147483648
    %v1183 = vxor.u32 %v1119, 2147483648
    %v1184 = vxor.u32 %v1120, 2147483648
    %v1185 = vxor.u32 %v1121, 2147483648
    %v1186 = vxor.u32 %v1122, 2147483648
    %v1187 = vxor.u32 %v1123, 2147483648
    %v1188 = vxor.u32 %v1124, 2147483648
    %v1189 = vxor.u32 %v1125, 2147483648
    %v1190 = vxor.u32 %v1126, 2147483648
    %v1191 = vxor.u32 %v1127, 2147483648
    %v1192 = vxor.u32 %v1128, 2147483648
    %v1193 = vxor.u32 %v1129, 2147483648
    %v1194 = vxor.u32 %v1130, 2147483648
    %v1195 = vxor.u32 %v1131, 2147483648
    %v1196 = vxor.u32 %v1132, 2147483648
    %v1197 = vxor.u32 %v1133, 2147483648
    %v1198 = vxor.u32 %v1134, 2147483648
    %v1199 = vxor.u32 %v1135, 2147483648
    %v1200 = vxor.u32 %v1136, 2147483648
    %v1201 = vxor.u32 %v1137, 2147483648
    %v1202 = vxor.u32 %v1138, 2147483648
    %v1203 = vxor.u32 %v1139, 2147483648
    %v1204 = vxor.u32 %v1140, 2147483648
    %v1205 = vxor.u32 %v1141, 2147483648
    %v1206 = vxor.u32 %v1142, 2147483648
    %v1207 = vxor.u32 %v1143, 2147483648
    %v1208 = vxor.u32 %v1144, 2147483648
    %v1209 = vxor.u32 %v1145, 2147483648
    %v1210 = vxor.u32 %v1146, 2147483648
    %v1211 = vxor.u32 %v1147, 2147483648
    %v1212 = vxor.u32 %v1148, 2147483648
    %v1213 = vxor.u32 %v1149, 2147483648
    %v1214 = vxor.u32 %v1150, 2147483648
    %v1215 = vxor.u32 %v1151, 2147483648
    %v1216 = vxor.u32 %v1152, 2147483648
    %v1217 = vxor.u32 %v1153, 2147483648
    %v1218 = vxor.u32 %v1154, 2147483648
    %v1219 = vxor.u32 %v1155, 2147483648
    %v1220 = vxor.u32 %v1156, 2147483648
    %v1221 = vxor.u32 %v1157, 2147483648
    %v1222 = vxor.u32 %v1158, 2147483648
    %v1223 = vxor.u32 %v1159, 2147483648
    %v1224 = vmul.f32 %v1160, 1.442695
    %v1225 = vpow.pop %v1224
    %v1226 = vmul.f32 %v1161, 1.442695
    %v1227 = vpow.pop %v1226
    %v1228 = vmul.f32 %v1162, 1.442695
    %v1229 = vpow.pop %v1228
    %v1230 = vmul.f32 %v1163, 1.442695
    %v1231 = vpow.pop %v1230
    %v1232 = vmul.f32 %v1164, 1.442695
    %v1233 = vpow.pop %v1232
    %v1234 = vmul.f32 %v1165, 1.442695
    %v1235 = vpow.pop %v1234
    %v1236 = vmul.f32 %v1166, 1.442695
    %v1237 = vpow.pop %v1236
    %v1238 = vmul.f32 %v1167, 1.442695
    %v1239 = vpow.pop %v1238
    %v1240 = vmul.f32 %v1168, 1.442695
    %v1241 = vpow.pop %v1240
    %v1242 = vmul.f32 %v1169, 1.442695
    %v1243 = vpow.pop %v1242
    %v1244 = vmul.f32 %v1170, 1.442695
    %v1245 = vpow.pop %v1244
    %v1246 = vmul.f32 %v1171, 1.442695
    %v1247 = vpow.pop %v1246
    %v1248 = vmul.f32 %v1172, 1.442695
    %v1249 = vpow.pop %v1248
    %v1250 = vmul.f32 %v1173, 1.442695
    %v1251 = vpow.pop %v1250
    %v1252 = vmul.f32 %v1174, 1.442695
    %v1253 = vpow.pop %v1252
    %v1254 = vmul.f32 %v1175, 1.442695
    %v1255 = vpow.pop %v1254
    %v1256 = vmul.f32 %v1176, 1.442695
    %v1257 = vpow.pop %v1256
    %v1258 = vmul.f32 %v1177, 1.442695
    %v1259 = vpow.pop %v1258
    %v1260 = vmul.f32 %v1178, 1.442695
    %v1261 = vpow.pop %v1260
    %v1262 = vmul.f32 %v1179, 1.442695
    %v1263 = vpow.pop %v1262
    %v1264 = vmul.f32 %v1180, 1.442695
    %v1265 = vpow.pop %v1264
    %v1266 = vmul.f32 %v1181, 1.442695
    %v1267 = vpow.pop %v1266
    %v1268 = vmul.f32 %v1182, 1.442695
    %v1269 = vpow.pop %v1268
    %v1270 = vmul.f32 %v1183, 1.442695
    %v1271 = vpow.pop %v1270
    %v1272 = vmul.f32 %v1184, 1.442695
    %v1273 = vpow.pop %v1272
    %v1274 = vmul.f32 %v1185, 1.442695
    %v1275 = vpow.pop %v1274
    %v1276 = vmul.f32 %v1186, 1.442695
    %v1277 = vpow.pop %v1276
    %v1278 = vmul.f32 %v1187, 1.442695
    %v1279 = vpow.pop %v1278
    %v1280 = vmul.f32 %v1188, 1.442695
    %v1281 = vpow.pop %v1280
    %v1282 = vmul.f32 %v1189, 1.442695
    %v1283 = vpow.pop %v1282
    %v1284 = vmul.f32 %v1190, 1.442695
    %v1285 = vpow.pop %v1284
    %v1286 = vmul.f32 %v1191, 1.442695
    %v1287 = vpow.pop %v1286
    %v1288 = vmul.f32 %v1192, 1.442695
    %v1289 = vpow.pop %v1288
    %v1290 = vmul.f32 %v1193, 1.442695
    %v1291 = vpow.pop %v1290
    %v1292 = vmul.f32 %v1194, 1.442695
    %v1293 = vpow.pop %v1292
    %v1294 = vmul.f32 %v1195, 1.442695
    %v1295 = vpow.pop %v1294
    %v1296 = vmul.f32 %v1196, 1.442695
    %v1297 = vpow.pop %v1296
    %v1298 = vmul.f32 %v1197, 1.442695
    %v1299 = vpow.pop %v1298
    %v1300 = vmul.f32 %v1198, 1.442695
    %v1301 = vpow.pop %v1300
    %v1302 = vmul.f32 %v1199, 1.442695
    %v1303 = vpow.pop %v1302
    %v1304 = vmul.f32 %v1200, 1.442695
    %v1305 = vpow.pop %v1304
    %v1306 = vmul.f32 %v1201, 1.442695
    %v1307 = vpow.pop %v1306
    %v1308 = vmul.f32 %v1202, 1.442695
    %v1309 = vpow.pop %v1308
    %v1310 = vmul.f32 %v1203, 1.442695
    %v1311 = vpow.pop %v1310
    %v1312 = vmul.f32 %v1204, 1.442695
    %v1313 = vpow.pop %v1312
    %v1314 = vmul.f32 %v1205, 1.442695
    %v1315 = vpow.pop %v1314
    %v1316 = vmul.f32 %v1206, 1.442695
    %v1317 = vpow.pop %v1316
    %v1318 = vmul.f32 %v1207, 1.442695
    %v1319 = vpow.pop %v1318
    %v1320 = vmul.f32 %v1208, 1.442695
    %v1321 = vpow.pop %v1320
    %v1322 = vmul.f32 %v1209, 1.442695
    %v1323 = vpow.pop %v1322
    %v1324 = vmul.f32 %v1210, 1.442695
    %v1325 = vpow.pop %v1324
    %v1326 = vmul.f32 %v1211, 1.442695
    %v1327 = vpow.pop %v1326
    %v1328 = vmul.f32 %v1212, 1.442695
    %v1329 = vpow.pop %v1328
    %v1330 = vmul.f32 %v1213, 1.442695
    %v1331 = vpow.pop %v1330
    %v1332 = vmul.f32 %v1214, 1.442695
    %v1333 = vpow.pop %v1332
    %v1334 = vmul.f32 %v1215, 1.442695
    %v1335 = vpow.pop %v1334
    %v1336 = vmul.f32 %v1216, 1.442695
    %v1337 = vpow.pop %v1336
    %v1338 = vmul.f32 %v1217, 1.442695
    %v1339 = vpow.pop %v1338
    %v1340 = vmul.f32 %v1218, 1.442695
    %v1341 = vpow.pop %v1340
    %v1342 = vmul.f32 %v1219, 1.442695
    %v1343 = vpow.pop %v1342
    %v1344 = vmul.f32 %v1220, 1.442695
    %v1345 = vpow.pop %v1344
    %v1346 = vmul.f32 %v1221, 1.442695
    %v1347 = vpow.pop %v1346
    %v1348 = vmul.f32 %v1222, 1.442695
    %v1349 = vpow.pop %v1348
    %v1350 = vmul.f32 %v1223, 1.442695
    %v1351 = vpow.pop %v1350
    %v1352 = vadd.f32 %v1225, 1.0
    %v1353 = vadd.f32 %v1227, 1.0
    %v1354 = vadd.f32 %v1229, 1.0
    %v1355 = vadd.f32 %v1231, 1.0
    %v1356 = vadd.f32 %v1233, 1.0
    %v1357 = vadd.f32 %v1235, 1.0
    %v1358 = vadd.f32 %v1237, 1.0
    %v1359 = vadd.f32 %v1239, 1.0
    %v1360 = vadd.f32 %v1241, 1.0
    %v1361 = vadd.f32 %v1243, 1.0
    %v1362 = vadd.f32 %v1245, 1.0
    %v1363 = vadd.f32 %v1247, 1.0
    %v1364 = vadd.f32 %v1249, 1.0
    %v1365 = vadd.f32 %v1251, 1.0
    %v1366 = vadd.f32 %v1253, 1.0
    %v1367 = vadd.f32 %v1255, 1.0
    %v1368 = vadd.f32 %v1257, 1.0
    %v1369 = vadd.f32 %v1259, 1.0
    %v1370 = vadd.f32 %v1261, 1.0
    %v1371 = vadd.f32 %v1263, 1.0
    %v1372 = vadd.f32 %v1265, 1.0
    %v1373 = vadd.f32 %v1267, 1.0
    %v1374 = vadd.f32 %v1269, 1.0
    %v1375 = vadd.f32 %v1271, 1.0
    %v1376 = vadd.f32 %v1273, 1.0
    %v1377 = vadd.f32 %v1275, 1.0
    %v1378 = vadd.f32 %v1277, 1.0
    %v1379 = vadd.f32 %v1279, 1.0
    %v1380 = vadd.f32 %v1281, 1.0
    %v1381 = vadd.f32 %v1283, 1.0
    %v1382 = vadd.f32 %v1285, 1.0
    %v1383 = vadd.f32 %v1287, 1.0
    %v1384 = vadd.f32 %v1289, 1.0
    %v1385 = vadd.f32 %v1291, 1.0
    %v1386 = vadd.f32 %v1293, 1.0
    %v1387 = vadd.f32 %v1295, 1.0
    %v1388 = vadd.f32 %v1297, 1.0
    %v1389 = vadd.f32 %v1299, 1.0
    %v1390 = vadd.f32 %v1301, 1.0
    %v1391 = vadd.f32 %v1303, 1.0
    %v1392 = vadd.f32 %v1305, 1.0
    %v1393 = vadd.f32 %v1307, 1.0
    %v1394 = vadd.f32 %v1309, 1.0
    %v1395 = vadd.f32 %v1311, 1.0
    %v1396 = vadd.f32 %v1313, 1.0
    %v1397 = vadd.f32 %v1315, 1.0
    %v1398 = vadd.f32 %v1317, 1.0
    %v1399 = vadd.f32 %v1319, 1.0
    %v1400 = vadd.f32 %v1321, 1.0
    %v1401 = vadd.f32 %v1323, 1.0
    %v1402 = vadd.f32 %v1325, 1.0
    %v1403 = vadd.f32 %v1327, 1.0
    %v1404 = vadd.f32 %v1329, 1.0
    %v1405 = vadd.f32 %v1331, 1.0
    %v1406 = vadd.f32 %v1333, 1.0
    %v1407 = vadd.f32 %v1335, 1.0
    %v1408 = vadd.f32 %v1337, 1.0
    %v1409 = vadd.f32 %v1339, 1.0
    %v1410 = vadd.f32 %v1341, 1.0
    %v1411 = vadd.f32 %v1343, 1.0
    %v1412 = vadd.f32 %v1345, 1.0
    %v1413 = vadd.f32 %v1347, 1.0
    %v1414 = vadd.f32 %v1349, 1.0
    %v1415 = vadd.f32 %v1351, 1.0
    %v1416 = vrcp.pop %v1352
    %v1417 = vmul.f32 1.0, %v1416
    %v1418 = vrcp.pop %v1353
    %v1419 = vmul.f32 1.0, %v1418
    %v1420 = vrcp.pop %v1354
    %v1421 = vmul.f32 1.0, %v1420
    %v1422 = vrcp.pop %v1355
    %v1423 = vmul.f32 1.0, %v1422
    %v1424 = vrcp.pop %v1356
    %v1425 = vmul.f32 1.0, %v1424
    %v1426 = vrcp.pop %v1357
    %v1427 = vmul.f32 1.0, %v1426
    %v1428 = vrcp.pop %v1358
    %v1429 = vmul.f32 1.0, %v1428
    %v1430 = vrcp.pop %v1359
    %v1431 = vmul.f32 1.0, %v1430
    %v1432 = vrcp.pop %v1360
    %v1433 = vmul.f32 1.0, %v1432
    %v1434 = vrcp.pop %v1361
    %v1435 = vmul.f32 1.0, %v1434
    %v1436 = vrcp.pop %v1362
    %v1437 = vmul.f32 1.0, %v1436
    %v1438 = vrcp.pop %v1363
    %v1439 = vmul.f32 1.0, %v1438
    %v1440 = vrcp.pop %v1364
    %v1441 = vmul.f32 1.0, %v1440
    %v1442 = vrcp.pop %v1365
    %v1443 = vmul.f32 1.0, %v1442
    %v1444 = vrcp.pop %v1366
    %v1445 = vmul.f32 1.0, %v1444
    %v1446 = vrcp.pop %v1367
    %v1447 = vmul.f32 1.0, %v1446
    %v1448 = vrcp.pop %v1368
    %v1449 = vmul.f32 1.0, %v1448
    %v1450 = vrcp.pop %v1369
    %v1451 = vmul.f32 1.0, %v1450
    %v1452 = vrcp.pop %v1370
    %v1453 = vmul.f32 1.0, %v1452
    %v1454 = vrcp.pop %v1371
    %v1455 = vmul.f32 1.0, %v1454
    %v1456 = vrcp.pop %v1372
    %v1457 = vmul.f32 1.0, %v1456
    %v1458 = vrcp.pop %v1373
    %v1459 = vmul.f32 1.0, %v1458
    %v1460 = vrcp.pop %v1374
    %v1461 = vmul.f32 1.0, %v1460
    %v1462 = vrcp.pop %v1375
    %v1463 = vmul.f32 1.0, %v1462
    %v1464 = vrcp.pop %v1376
    %v1465 = vmul.f32 1.0, %v1464
    %v1466 = vrcp.pop %v1377
    %v1467 = vmul.f32 1.0, %v1466
    %v1468 = vrcp.pop %v1378
    %v1469 = vmul.f32 1.0, %v1468
    %v1470 = vrcp.pop %v1379
    %v1471 = vmul.f32 1.0, %v1470
    %v1472 = vrcp.pop %v1380
    %v1473 = vmul.f32 1.0, %v1472
    %v1474 = vrcp.pop %v1381
    %v1475 = vmul.f32 1.0, %v1474
    %v1476 = vrcp.pop %v1382
    %v1477 = vmul.f32 1.0, %v1476
    %v1478 = vrcp.pop %v1383
    %v1479 = vmul.f32 1.0, %v1478
    %v1480 = vrcp.pop %v1384
    %v1481 = vmul.f32 1.0, %v1480
    %v1482 = vrcp.pop %v1385
    %v1483 = vmul.f32 1.0, %v1482
    %v1484 = vrcp.pop %v1386
    %v1485 = vmul.f32 1.0, %v1484
    %v1486 = vrcp.pop %v1387
    %v1487 = vmul.f32 1.0, %v1486
    %v1488 = vrcp.pop %v1388
    %v1489 = vmul.f32 1.0, %v1488
    %v1490 = vrcp.pop %v1389
    %v1491 = vmul.f32 1.0, %v1490
    %v1492 = vrcp.pop %v1390
    %v1493 = vmul.f32 1.0, %v1492
    %v1494 = vrcp.pop %v1391
    %v1495 = vmul.f32 1.0, %v1494
    %v1496 = vrcp.pop %v1392
    %v1497 = vmul.f32 1.0, %v1496
    %v1498 = vrcp.pop %v1393
    %v1499 = vmul.f32 1.0, %v1498
    %v1500 = vrcp.pop %v1394
    %v1501 = vmul.f32 1.0, %v1500
    %v1502 = vrcp.pop %v1395
    %v1503 = vmul.f32 1.0, %v1502
    %v1504 = vrcp.pop %v1396
    %v1505 = vmul.f32 1.0, %v1504
    %v1506 = vrcp.pop %v1397
    %v1507 = vmul.f32 1.0, %v1506
    %v1508 = vrcp.pop %v1398
    %v1509 = vmul.f32 1.0, %v1508
    %v1510 = vrcp.pop %v1399
    %v1511 = vmul.f32 1.0, %v1510
    %v1512 = vrcp.pop %v1400
    %v1513 = vmul.f32 1.0, %v1512
    %v1514 = vrcp.pop %v1401
    %v1515 = vmul.f32 1.0, %v1514
    %v1516 = vrcp.pop %v1402
    %v1517 = vmul.f32 1.0, %v1516
    %v1518 = vrcp.pop %v1403
    %v1519 = vmul.f32 1.0, %v1518
    %v1520 = vrcp.pop %v1404
    %v1521 = vmul.f32 1.0, %v1520
    %v1522 = vrcp.pop %v1405
    %v1523 = vmul.f32 1.0, %v1522
    %v1524 = vrcp.pop %v1406
    %v1525 = vmul.f32 1.0, %v1524
    %v1526 = vrcp.pop %v1407
    %v1527 = vmul.f32 1.0, %v1526
    %v1528 = vrcp.pop %v1408
    %v1529 = vmul.f32 1.0, %v1528
    %v1530 = vrcp.pop %v1409
    %v1531 = vmul.f32 1.0, %v1530
    %v1532 = vrcp.pop %v1410
    %v1533 = vmul.f32 1.0, %v1532
    %v1534 = vrcp.pop %v1411
    %v1535 = vmul.f32 1.0, %v1534
    %v1536 = vrcp.pop %v1412
    %v1537 = vmul.f32 1.0, %v1536
    %v1538 = vrcp.pop %v1413
    %v1539 = vmul.f32 1.0, %v1538
    %v1540 = vrcp.pop %v1414
    %v1541 = vmul.f32 1.0, %v1540
    %v1542 = vrcp.pop %v1415
    %v1543 = vmul.f32 1.0, %v1542
    %v1544 = vadd.f32 %v1417, %v1425
    %v1545 = vadd.f32 %v1544, %v1433
    %v1546 = vadd.f32 %v1545, %v1441
    %v1547 = vadd.f32 %v1546, %v1449
    %v1548 = vadd.f32 %v1547, %v1457
    %v1549 = vadd.f32 %v1548, %v1465
    %v1550 = vadd.f32 %v1549, %v1473
    %v1551 = vadd.f32 %v1550, %v1481
    %v1552 = vadd.f32 %v1551, %v1489
    %v1553 = vadd.f32 %v1552, %v1497
    %v1554 = vadd.f32 %v1553, %v1505
    %v1555 = vadd.f32 %v1554, %v1513
    %v1556 = vadd.f32 %v1555, %v1521
    %v1557 = vadd.f32 %v1556, %v1529
    %v1558 = vadd.f32 %v1557, %v1537
    %v1559 = vrot.slane %v1558, 4
    %v1560 = vadd.f32 %v1558, %v1559
    %v1561 = vrot.slane %v1560, 2
    %v1562 = vadd.f32 %v1560, %v1561
    %v1563 = vrot.slane %v1562, 1
    %v1564 = vadd.f32 %v1562, %v1563
    %v1565 = vadd.f32 %v1419, %v1427
    %v1566 = vadd.f32 %v1565, %v1435
    %v1567 = vadd.f32 %v1566, %v1443
    %v1568 = vadd.f32 %v1567, %v1451
    %v1569 = vadd.f32 %v1568, %v1459
    %v1570 = vadd.f32 %v1569, %v1467
    %v1571 = vadd.f32 %v1570, %v1475
    %v1572 = vadd.f32 %v1571, %v1483
    %v1573 = vadd.f32 %v1572, %v1491
    %v1574 = vadd.f32 %v1573, %v1499
    %v1575 = vadd.f32 %v1574, %v1507
    %v1576 = vadd.f32 %v1575, %v1515
    %v1577 = vadd.f32 %v1576, %v1523
    %v1578 = vadd.f32 %v1577, %v1531
    %v1579 = vadd.f32 %v1578, %v1539
    %v1580 = vrot.slane %v1579, 4
    %v1581 = vadd.f32 %v1579, %v1580
    %v1582 = vrot.slane %v1581, 2
    %v1583 = vadd.f32 %v1581, %v1582
    %v1584 = vrot.slane %v1583, 1
    %v1585 = vadd.f32 %v1583, %v1584
    %v1586 = vadd.f32 %v1421, %v1429
    %v1587 = vadd.f32 %v1586, %v1437
    %v1588 = vadd.f32 %v1587, %v1445
    %v1589 = vadd.f32 %v1588, %v1453
    %v1590 = vadd.f32 %v1589, %v1461
    %v1591 = vadd.f32 %v1590, %v1469
    %v1592 = vadd.f32 %v1591, %v1477
    %v1593 = vadd.f32 %v1592, %v1485
    %v1594 = vadd.f32 %v1593, %v1493
    %v1595 = vadd.f32 %v1594, %v1501
    %v1596 = vadd.f32 %v1595, %v1509
    %v1597 = vadd.f32 %v1596, %v1517
    %v1598 = vadd.f32 %v1597, %v1525
    %v1599 = vadd.f32 %v1598, %v1533
    %v1600 = vadd.f32 %v1599, %v1541
    %v1601 = vrot.slane %v1600, 4
    %v1602 = vadd.f32 %v1600, %v1601
    %v1603 = vrot.slane %v1602, 2
    %v1604 = vadd.f32 %v1602, %v1603
    %v1605 = vrot.slane %v1604, 1
    %v1606 = vadd.f32 %v1604, %v1605
    %v1607 = vadd.f32 %v1423, %v1431
    %v1608 = vadd.f32 %v1607, %v1439
    %v1609 = vadd.f32 %v1608, %v1447
    %v1610 = vadd.f32 %v1609, %v1455
    %v1611 = vadd.f32 %v1610, %v1463
    %v1612 = vadd.f32 %v1611, %v1471
    %v1613 = vadd.f32 %v1612, %v1479
    %v1614 = vadd.f32 %v1613, %v1487
    %v1615 = vadd.f32 %v1614, %v1495
    %v1616 = vadd.f32 %v1615, %v1503
    %v1617 = vadd.f32 %v1616, %v1511
    %v1618 = vadd.f32 %v1617, %v1519
    %v1619 = vadd.f32 %v1618, %v1527
    %v1620 = vadd.f32 %v1619, %v1535
    %v1621 = vadd.f32 %v1620, %v1543
    %v1622 = vrot.slane %v1621, 4
    %v1623 = vadd.f32 %v1621, %v1622
    %v1624 = vrot.slane %v1623, 2
    %v1625 = vadd.f32 %v1623, %v1624
    %v1626 = vrot.slane %v1625, 1
    %v1627 = vadd.f32 %v1625, %v1626
    %v1628 = vmul.f32 %v1564, 0.0078125
    %v1629 = vmul.f32 %v1585, 0.0078125
    %v1630 = vmul.f32 %v1606, 0.0078125
    %v1631 = vmul.f32 %v1627, 0.0078125
    %v1632 = vsub.f32 1.0, %v1628
    %v1633 = vsub.f32 1.0, %v1629
    %v1634 = vsub.f32 1.0, %v1630
    %v1635 = vsub.f32 1.0, %v1631
    %v1636 = vld [vmem:[#allocation2] sm:$0x1]
    %v1637 = vxor.u32 %v1636, 2147483648
    %v1638 = vmul.f32 %v1637, 1.442695
    %v1639 = vpow.pop %v1638
    %v1640 = vadd.f32 %v1639, 1.0
    %v1641 = vrcp.pop %v1640
    %v1642 = vmul.f32 1.0, %v1641
    %1644 = vset.pattern.permute.xlu0 0
    %1645 = vperm.xlu0 %1644, %v1642
    %v1646 = vpop.permute.xlu0 %1645
    %v1648 = vlaneseq
    %v1649 = vshrl.u32 %v1648, 7
    %v1650 = vsub.s32 0, %v1649
    %v1651 = vrot.slane %v1646, %v1650
    %v1652 = vmul.f32 %v1651, %v836
    %v1653 = vmul.f32 %v1651, %v837
    %v1654 = vmul.f32 %v1651, %v838
    %v1655 = vmul.f32 %v1651, %v839
    %v1656 = vsub.f32 1.0, %v1642
    %1658 = vset.pattern.permute.xlu0 0
    %1659 = vperm.xlu0 %1658, %v1656
    %v1660 = vpop.permute.xlu0 %1659
    %v1662 = vlaneseq
    %v1663 = vshrl.u32 %v1662, 7
    %v1664 = vsub.s32 0, %v1663
    %v1665 = vrot.slane %v1660, %v1664
    %v1666 = vmul.f32 %v1665, %v1632
    %v1667 = vmul.f32 %v1665, %v1633
    %v1668 = vmul.f32 %v1665, %v1634
    %v1669 = vmul.f32 %v1665, %v1635
    %v1670 = vadd.f32 %v1652, %v1666
    %v1671 = vadd.f32 %v1653, %v1667
    %v1672 = vadd.f32 %v1654, %v1668
    %v1673 = vadd.f32 %v1655, %v1669
    %v1678 = vcombine.low %v1670, %v1671
    %v1679 = vcombine.low %v1672, %v1673
    %v1681 = vunpack.c.l.s4 1966171168
    %v1682 = vunpack.c.0.s8 %v1681
    %v1683 = vlaneseq
    %v1684 = vshrl.u32 %v1683, 7
    %v1685 = vsub.s32 %v1682, %v1684
    %v1686 = vrot.slane %v1678, %v1685
    %v1688 = vunpack.c.l.s4 1966171168
    %v1689 = vunpack.c.0.s8 %v1688
    %v1690 = vlaneseq
    %v1691 = vshrl.u32 %v1690, 7
    %v1692 = vsub.s32 %v1689, %v1691
    %v1693 = vrot.slane %v1679, %v1692
    %v1694 = vcombine.low %v1686, %v1693
    %v1696 = vunpack.c.l.s4 1966171168
    %v1697 = vunpack.c.0.s8 %v1696
    %v1698 = vlaneseq
    %v1699 = vshrl.u32 %v1698, 7
    %v1700 = vsub.s32 %v1697, %v1699
    %v1701 = vrot.slane %v1694, %v1700
    %v1703 = vlaneseq
    %vm1704 = vcmp.ge.s32.totalorder %v1703, 0
    %vm1705 = vcmp.lt.s32.totalorder %v1703, 512
    %vm1706 = vmand %vm1704, %vm1705
    %1707 = vst.msk [vmem:[#allocation3] sm:$0xf] %vm1706, %v1701
    // Predicated region
    $region26: #{tpu_custom_call.1} parent=1 // pred_check
      _
    $region27: #{tpu_custom_call.1} parent=1 // pred_check_branch
      %1709 = sbr.rel (0) target = $region29
    $region28: #{tpu_custom_call.1} parent=1 // pred_region
      %s1711 = ssub.s32 64, 64
      %1712 = vsyncadd [#allocation4], %s1711
      %s1714 = sshll.u32 [#allocation3], 4
      %s1715 = int_to_ptr.vmem [resolvable:$true] %s1714
      %1717 = dma.vmem_to_hbm [thread:$0]  %s1715, 64, %s6, [#allocation4]
    $region29: #{tpu_custom_call.1} parent=1 // pred_fallthru
      _
    // Predicated region
    $region30: #{tpu_custom_call.1} parent=1 // pred_check
      _
    $region31: #{tpu_custom_call.1} parent=1 // pred_check_branch
      %1719 = sbr.rel (0) target = $region33
    $region32: #{tpu_custom_call.1} parent=1 // pred_region
      %1720 = dma.done [#allocation4], 64
    $region33: #{tpu_custom_call.1} parent=1 // pred_fallthru
      _
    %1721 = vsyncpa [#allocation4], 1

</llo_original>
